<compile_context>
chip_gen: v7x
topology: tpu7x:2x2x1
jax: 0.10.0
libtpu: 0.0.40
codegen_flags: <defaults>
</compile_context>

<pallas_src>
import math
from functools import partial

import numpy as np
import jax
import jax.numpy as jnp
from jax.experimental import pallas as pl
from jax.experimental.pallas import tpu as pltpu

LN_EPS = 1e-5     # torch LayerNorm default


def get_sinusoid_encoding_table(n_position, d_hid, padding_idx=None):
    """Exact replica of the PyTorch helper (numpy math)."""
    def cal_angle(position, hid_idx):
        return position / np.power(10000, 2 * (hid_idx // 2) / d_hid)

    def get_posi_angle_vec(position):
        return [cal_angle(position, hid_j) for hid_j in range(d_hid)]

    table = np.array([get_posi_angle_vec(pos_i) for pos_i in range(n_position)])
    table[:, 0::2] = np.sin(table[:, 0::2])
    table[:, 1::2] = np.cos(table[:, 1::2])
    if padding_idx is not None:
        table[padding_idx] = 0.0
    return jnp.asarray(table, dtype=jnp.float32)


# Row order of the packed (6, D) per-layer vector bundle.
_VEC_BO, _VEC_G1, _VEC_BE1, _VEC_B2, _VEC_G2, _VEC_BE2 = range(6)


# ----------------------------------------------------------------------------
# Fused kernel: full encoder stack + maxpool/tanh head.
# grid = (B, num_layers): batch axis "parallel" (megacore), layer axis
# "arbitrary" (activation carried across layers in a VMEM scratch).
# ----------------------------------------------------------------------------
def make_stack_kernel(S, D, DFF, nhead, nlayers):
    dh = D // nhead

    def kernel(x_ref, qkvw_ref, qkvb_ref, wo_ref, w1_ref, b1_ref, w2_ref,
               vecs_ref, hw_ref, hb_ref, hid_ref, out_ref, h_scr):
        layer = pl.program_id(1)

        # Layer 0: load this batch element's (PE-added) tokens into the
        # resident VMEM activation.
        @pl.when(layer == 0)
        def _():
            h_scr[...] = x_ref[0]

        x = h_scr[...]                                   # (S, D) f32
        vecs = vecs_ref[0]                               # (6, D) f32
        bo = vecs[_VEC_BO:_VEC_BO + 1, :]
        g1 = vecs[_VEC_G1:_VEC_G1 + 1, :]
        be1 = vecs[_VEC_BE1:_VEC_BE1 + 1, :]
        b2 = vecs[_VEC_B2:_VEC_B2 + 1, :]
        g2 = vecs[_VEC_G2:_VEC_G2 + 1, :]
        be2 = vecs[_VEC_BE2:_VEC_BE2 + 1, :]

        # --- fused QKV projection: one MXU matmul (bf16 in, f32 accumulate);
        #     the 1/sqrt(dh) scale is already folded into the Q columns. ---
        qkv = jnp.dot(x.astype(jnp.bfloat16), qkvw_ref[0],
                      preferred_element_type=jnp.float32) + qkvb_ref[0]

        # --- per-head attention.  The grid tile is exactly one batch element,
        #     so no block-diagonal mask is needed.  Head outputs accumulate
        #     straight through the (nhead, dh, D) slices of W_o (leading-axis
        #     ref indexing: no sublane relayout). ---
        attn = jnp.zeros((S, D), jnp.float32)
        for hh in range(nhead):                          # static unrolled
            lo = hh * dh
            qh = qkv[:, lo:lo + dh].astype(jnp.bfloat16)
            kh = qkv[:, D + lo:D + lo + dh].astype(jnp.bfloat16)
            vh = qkv[:, 2 * D + lo:2 * D + lo + dh].astype(jnp.bfloat16)
            # scores = q @ k^T via dot_general (contraction on trailing dims)
            s = jax.lax.dot_general(qh, kh, (((1,), (1,)), ((), ())),
                                    preferred_element_type=jnp.float32)
            s = s - jnp.max(s, axis=-1, keepdims=True)
            p = jnp.exp(s)
            p = p * pl.reciprocal(jnp.sum(p, axis=-1, keepdims=True),
                                  approx=True)
            ctx = jnp.dot(p.astype(jnp.bfloat16), vh,
                          preferred_element_type=jnp.float32)
            attn = attn + jnp.dot(ctx.astype(jnp.bfloat16), wo_ref[0, hh],
                                  preferred_element_type=jnp.float32)
        attn = attn + bo

        # --- residual + LayerNorm 1 (post-norm; dropout = identity in eval) ---
        h1 = x + attn
        mu = jnp.mean(h1, axis=-1, keepdims=True)
        var = jnp.mean((h1 - mu) ** 2, axis=-1, keepdims=True)
        h1 = (h1 - mu) * jax.lax.rsqrt(var + LN_EPS) * g1 + be1

        # --- feed-forward (ReLU) ---
        f = jnp.dot(h1.astype(jnp.bfloat16), w1_ref[0],
                    preferred_element_type=jnp.float32) + b1_ref[0]
        f = jnp.maximum(f, 0.0)
        f = jnp.dot(f.astype(jnp.bfloat16), w2_ref[0],
                    preferred_element_type=jnp.float32) + b2

        # --- residual + LayerNorm 2 ---
        h2 = h1 + f
        mu2 = jnp.mean(h2, axis=-1, keepdims=True)
        var2 = jnp.mean((h2 - mu2) ** 2, axis=-1, keepdims=True)
        h_out = (h2 - mu2) * jax.lax.rsqrt(var2 + LN_EPS) * g2 + be2

        hid_ref[0, 0] = h_out       # per-layer hidden state (pipelined writeback)
        h_scr[...] = h_out          # carry activation to next layer (stays in VMEM)

        # --- fused head at the last layer: maxpool over seq + tanh(Linear) ---
        @pl.when(layer == nlayers - 1)
        def _():
            embd = jnp.max(h_out, axis=0, keepdims=True)          # (1, D)
            y = jnp.dot(embd.astype(jnp.bfloat16), hw_ref[...],
                        preferred_element_type=jnp.float32) + hb_ref[...]
            out_ref[0] = jnp.tanh(y)

    return kernel


# ----------------------------------------------------------------------------
# Parameter packing: 16 tensors/layer -> 7 stacked arrays, bf16 MXU operands.
# W_o is stored (L, nhead, dh, D) so the kernel can index heads on leading axes.
# ----------------------------------------------------------------------------
def pack_layer_params(layer_params, nhead):
    D = layer_params[0]["wq"].shape[0]
    dh = D // nhead
    scale = 1.0 / math.sqrt(dh)
    qkv_w, qkv_b, wo, w1, b1, w2, vecs = [], [], [], [], [], [], []
    for p in layer_params:
        qkv_w.append(jnp.concatenate([p["wq"] * scale, p["wk"], p["wv"]], axis=1))
        qkv_b.append(jnp.concatenate([p["bq"] * scale, p["bk"], p["bv"]], axis=1))
        wo.append(p["wo"].reshape(nhead, dh, D))
        w1.append(p["w1"])
        b1.append(p["b1"])
        w2.append(p["w2"])
        vecs.append(jnp.concatenate(
            [p["bo"], p["g1"], p["be1"], p["b2"], p["g2"], p["be2"]], axis=0))
    return {
        "qkv_w": jnp.stack(qkv_w).astype(jnp.bfloat16),   # (L, D, 3D)
        "qkv_b": jnp.stack(qkv_b),                        # (L, 1, 3D) f32
        "wo":    jnp.stack(wo).astype(jnp.bfloat16),      # (L, nhead, dh, D)
        "w1":    jnp.stack(w1).astype(jnp.bfloat16),      # (L, D, DFF)
        "b1":    jnp.stack(b1),                           # (L, 1, DFF) f32
        "w2":    jnp.stack(w2).astype(jnp.bfloat16),      # (L, DFF, D)
        "vecs":  jnp.stack(vecs),                         # (L, 6, D) f32
    }


# ----------------------------------------------------------------------------
# Full forward: single pallas_call (PE add in wrapper, no output relayout)
# ----------------------------------------------------------------------------
@partial(jax.jit, static_argnames=("nhead", "use_pe"))
def transformer_encoder_forward(x, pe_table, packed, head_w, head_b,
                                nhead, use_pe=True):
    B, S, D = x.shape
    L, _, DFF = packed["w1"].shape

    h0 = x + pe_table[:S][None, :, :] if use_pe else x          # (B, S, D)
    head_w_bf16 = head_w.astype(jnp.bfloat16)

    hid, out = pl.pallas_call(
        make_stack_kernel(S, D, DFF, nhead, L),
        out_shape=(jax.ShapeDtypeStruct((L, B, S, D), jnp.float32),
                   jax.ShapeDtypeStruct((B, 1, D), jnp.float32)),
        grid=(B, L),
        in_specs=[
            pl.BlockSpec((1, S, D), lambda b, l: (b, 0, 0)),           # tokens (+PE)
            pl.BlockSpec((1, D, 3 * D), lambda b, l: (l, 0, 0)),       # fused QKV weight
            pl.BlockSpec((1, 1, 3 * D), lambda b, l: (l, 0, 0)),       # fused QKV bias
            pl.BlockSpec((1, nhead, D // nhead, D),
                         lambda b, l: (l, 0, 0, 0)),                   # wo (per-head)
            pl.BlockSpec((1, D, DFF), lambda b, l: (l, 0, 0)),         # w1
            pl.BlockSpec((1, 1, DFF), lambda b, l: (l, 0, 0)),         # b1
            pl.BlockSpec((1, DFF, D), lambda b, l: (l, 0, 0)),         # w2
            pl.BlockSpec((1, 6, D), lambda b, l: (l, 0, 0)),           # packed biases/gains
            pl.BlockSpec((D, D), lambda b, l: (0, 0)),                 # head linear weight
            pl.BlockSpec((1, D), lambda b, l: (0, 0)),                 # head linear bias
        ],
        out_specs=(
            pl.BlockSpec((1, 1, S, D), lambda b, l: (l, b, 0, 0)),     # per-layer hidden
            pl.BlockSpec((1, 1, D), lambda b, l: (b, 0, 0)),           # final embedding
        ),
        scratch_shapes=[pltpu.VMEM((S, D), jnp.float32)],              # resident activation
        compiler_params=pltpu.CompilerParams(
            dimension_semantics=("parallel", "arbitrary"),  # batch parallel, layer carries dep
            vmem_limit_bytes=32 << 20),                     # explicit scoped-VMEM headroom
    )(h0, packed["qkv_w"], packed["qkv_b"], packed["wo"], packed["w1"],
      packed["b1"], packed["w2"], packed["vecs"], head_w_bf16, head_b)

    # hidden states stacked over layers in (L, B, S, D) (no relayout pass)
    return out.reshape(B, D), hid


# ----------------------------------------------------------------------------
# Deterministic synthetic parameters (torch-like shapes, f32 canonical)
# ----------------------------------------------------------------------------
def init_layer_params(key, D, DFF):
    ks = jax.random.split(key, 12)

    def w(k, shape):
        return (0.08 * jax.random.normal(k, shape)).astype(jnp.float32)

    def b(k, shape):
        return (0.02 * jax.random.normal(k, shape)).astype(jnp.float32)

    return {
        "wq": w(ks[0], (D, D)),    "bq": b(ks[1], (1, D)),
        "wk": w(ks[2], (D, D)),    "bk": b(ks[3], (1, D)),
        "wv": w(ks[4], (D, D)),    "bv": b(ks[5], (1, D)),
        "wo": w(ks[6], (D, D)),    "bo": b(ks[7], (1, D)),
        "w1": w(ks[8], (D, DFF)),  "b1": b(ks[9], (1, DFF)),
        "w2": w(ks[10], (DFF, D)), "b2": b(ks[11], (1, D)),
        "g1": jnp.ones((1, D), jnp.float32), "be1": jnp.zeros((1, D), jnp.float32),
        "g2": jnp.ones((1, D), jnp.float32), "be2": jnp.zeros((1, D), jnp.float32),
    }


# ----------------------------------------------------------------------------
# Pure-JAX reference (f32) for the correctness sanity check
# ----------------------------------------------------------------------------
def _ln(x, g, b):
    mu = jnp.mean(x, axis=-1, keepdims=True)
    var = jnp.mean((x - mu) ** 2, axis=-1, keepdims=True)
    return (x - mu) * jax.lax.rsqrt(var + LN_EPS) * g + b


def ref_layer(x, p, nhead):
    B, S, D = x.shape
    dh = D // nhead
    q = x @ p["wq"] + p["bq"][0]
    k = x @ p["wk"] + p["bk"][0]
    v = x @ p["wv"] + p["bv"][0]
    qh = q.reshape(B, S, nhead, dh).transpose(0, 2, 1, 3)
    kh = k.reshape(B, S, nhead, dh).transpose(0, 2, 1, 3)
    vh = v.reshape(B, S, nhead, dh).transpose(0, 2, 1, 3)
    s = jnp.einsum("bhsd,bhtd->bhst", qh, kh) / math.sqrt(dh)
    a = jax.nn.softmax(s, axis=-1)
    ctx = jnp.einsum("bhst,bhtd->bhsd", a, vh).transpose(0, 2, 1, 3).reshape(B, S, D)
    attn = ctx @ p["wo"] + p["bo"][0]
    h1 = _ln(x + attn, p["g1"][0], p["be1"][0])
    f = jnp.maximum(h1 @ p["w1"] + p["b1"][0], 0.0) @ p["w2"] + p["b2"][0]
    return _ln(h1 + f, p["g2"][0], p["be2"][0])


def ref_forward(x, pe_table, layers, head_w, head_b, nhead):
    h = x + pe_table[:x.shape[1]][None]
    hiddens = []
    for p in layers:
        h = ref_layer(h, p, nhead)
        hiddens.append(h)                                # (B, S, D) per layer
    embd = jnp.max(h, axis=1)
    return jnp.tanh(embd @ head_w + head_b[0]), hiddens


if __name__ == "__main__":
    # small shapes consistent with the module: batch=2, seq=8, input_dim=32, nhead=4
    B, S, D, NHEAD, NLAYERS = 2, 8, 32, 4, 2
    DFF = D          # dim_feedforward=None -> defaults to _inp
    MAX_POS = 512

    key = jax.random.PRNGKey(0)
    kx, khead, kp = jax.random.split(key, 3)
    x = jax.random.normal(kx, (B, S, D), jnp.float32)

    pe_table = get_sinusoid_encoding_table(MAX_POS, D, padding_idx=0)

    layer_keys = jax.random.split(kp, NLAYERS)
    layer_params = [init_layer_params(k, D, DFF) for k in layer_keys]
    khw, khb = jax.random.split(khead)
    head_w = (0.08 * jax.random.normal(khw, (D, D))).astype(jnp.float32)
    head_b = (0.02 * jax.random.normal(khb, (1, D))).astype(jnp.float32)

    packed = pack_layer_params(layer_params, NHEAD)

    out, hidden = transformer_encoder_forward(
        x, pe_table, packed, head_w, head_b, nhead=NHEAD, use_pe=True)
    out = jax.block_until_ready(out)
    hidden = jax.block_until_ready(hidden)
    hidden_states = [hidden[i] for i in range(NLAYERS)]   # each (B, S, D)

    # sanity check against the pure-JAX reference (bf16 MXU + approx recip:
    # loose 2e-2 tolerance documented above)
    out_ref, hiddens_ref = ref_forward(x, pe_table, layer_params,
                                       head_w, head_b, NHEAD)
    np.testing.assert_allclose(np.asarray(out), np.asarray(out_ref),
                               rtol=2e-2, atol=2e-2)
    for h_k, h_r in zip(hidden_states, hiddens_ref):
        np.testing.assert_allclose(np.asarray(h_k), np.asarray(h_r),
                                   rtol=2e-2, atol=2e-2)

    assert out.shape == (B, D) and len(hidden_states) == NLAYERS
    # TODO(synk): dropout is train-time only (eval-mode identity here); mask /
    # src_key_padding_mask are None in this configuration and not modeled.
    print("KERNEL_OK")
</pallas_src>

<mosaic_0001>
module attributes {stable_mosaic.version = 11 : i64} {
  func.func @kernel(%arg0: i32, %arg1: i32, %arg2: memref<1x8x32xf32, #tpu.memory_space<vmem>>, %arg3: memref<1x32x96xbf16, #tpu.memory_space<vmem>>, %arg4: memref<1x1x96xf32, #tpu.memory_space<vmem>>, %arg5: memref<1x4x8x32xbf16, #tpu.memory_space<vmem>>, %arg6: memref<1x32x32xbf16, #tpu.memory_space<vmem>>, %arg7: memref<1x1x32xf32, #tpu.memory_space<vmem>>, %arg8: memref<1x32x32xbf16, #tpu.memory_space<vmem>>, %arg9: memref<1x6x32xf32, #tpu.memory_space<vmem>>, %arg10: memref<32x32xbf16, #tpu.memory_space<vmem>>, %arg11: memref<1x32xf32, #tpu.memory_space<vmem>>, %arg12: memref<1x1x8x32xf32, #tpu.memory_space<vmem>>, %arg13: memref<1x1x32xf32, #tpu.memory_space<vmem>>, %arg14: memref<8x32xf32, #tpu.memory_space<vmem>>) attributes {dimension_semantics = [#tpu.dimension_semantics<parallel>, #tpu.dimension_semantics<arbitrary>], iteration_bounds = array<i64: 2, 2>, scalar_prefetch = 0 : i64, scratch_operands = 1 : i64, tpu.core_type = #tpu.core_type<tc>, window_params = [{transform_indices = @transform_0, window_bounds = array<i64: 1, 8, 32>}, {transform_indices = @transform_1, window_bounds = array<i64: 1, 32, 96>}, {transform_indices = @transform_2, window_bounds = array<i64: 1, 1, 96>}, {transform_indices = @transform_3, window_bounds = array<i64: 1, 4, 8, 32>}, {transform_indices = @transform_4, window_bounds = array<i64: 1, 32, 32>}, {transform_indices = @transform_5, window_bounds = array<i64: 1, 1, 32>}, {transform_indices = @transform_6, window_bounds = array<i64: 1, 32, 32>}, {transform_indices = @transform_7, window_bounds = array<i64: 1, 6, 32>}, {pipeline_mode = #tpu.pipeline_mode<synchronous>, transform_indices = @transform_8, window_bounds = array<i64: 32, 32>}, {pipeline_mode = #tpu.pipeline_mode<synchronous>, transform_indices = @transform_9, window_bounds = array<i64: 1, 32>}, {transform_indices = @transform_10, window_bounds = array<i64: 1, 1, 8, 32>}, {transform_indices = @transform_11, window_bounds = array<i64: 1, 1, 32>}]} {
    %c0_i32 = arith.constant 0 : i32
    %0 = arith.cmpi eq, %arg1, %c0_i32 : i32
    %1 = arith.extui %0 : i1 to i32
    %c0_i32_0 = arith.constant 0 : i32
    %2 = arith.cmpi ne, %1, %c0_i32_0 : i32
    scf.if %2 {
      %c0_74 = arith.constant 0 : index
      %c0_75 = arith.constant 0 : index
      %c0_76 = arith.constant 0 : index
      %188 = vector.load %arg2[%c0_74, %c0_75, %c0_76] : memref<1x8x32xf32, #tpu.memory_space<vmem>>, vector<1x8x32xf32>
      %189 = vector.shape_cast %188 : vector<1x8x32xf32> to vector<8x32xf32>
      %c0_77 = arith.constant 0 : index
      %c0_78 = arith.constant 0 : index
      %190 = vector.load %arg14[%c0_77, %c0_78] : memref<8x32xf32, #tpu.memory_space<vmem>>, vector<8x32xf32>
      tpu.vector_store %arg14[%c0_77, %c0_78], %189 {strides = array<i32>} : memref<8x32xf32, #tpu.memory_space<vmem>>, vector<8x32xf32>,
    } else {
    }
    %c0 = arith.constant 0 : index
    %c0_1 = arith.constant 0 : index
    %3 = vector.load %arg14[%c0, %c0_1] : memref<8x32xf32, #tpu.memory_space<vmem>>, vector<8x32xf32>
    %c0_2 = arith.constant 0 : index
    %c0_3 = arith.constant 0 : index
    %c0_4 = arith.constant 0 : index
    %4 = vector.load %arg9[%c0_2, %c0_3, %c0_4] : memref<1x6x32xf32, #tpu.memory_space<vmem>>, vector<1x6x32xf32>
    %5 = vector.shape_cast %4 : vector<1x6x32xf32> to vector<6x32xf32>
    %6 = vector.extract_strided_slice %5 {offsets = [0, 0], sizes = [1, 32], strides = [1, 1]} : vector<6x32xf32> to vector<1x32xf32>
    %7 = vector.extract_strided_slice %5 {offsets = [1, 0], sizes = [1, 32], strides = [1, 1]} : vector<6x32xf32> to vector<1x32xf32>
    %8 = vector.extract_strided_slice %5 {offsets = [2, 0], sizes = [1, 32], strides = [1, 1]} : vector<6x32xf32> to vector<1x32xf32>
    %9 = vector.extract_strided_slice %5 {offsets = [3, 0], sizes = [1, 32], strides = [1, 1]} : vector<6x32xf32> to vector<1x32xf32>
    %10 = vector.extract_strided_slice %5 {offsets = [4, 0], sizes = [1, 32], strides = [1, 1]} : vector<6x32xf32> to vector<1x32xf32>
    %11 = vector.extract_strided_slice %5 {offsets = [5, 0], sizes = [1, 32], strides = [1, 1]} : vector<6x32xf32> to vector<1x32xf32>
    %12 = arith.truncf %3 : vector<8x32xf32> to vector<8x32xbf16>
    %c0_5 = arith.constant 0 : index
    %c0_6 = arith.constant 0 : index
    %c0_7 = arith.constant 0 : index
    %13 = vector.load %arg3[%c0_5, %c0_6, %c0_7] : memref<1x32x96xbf16, #tpu.memory_space<vmem>>, vector<1x32x96xbf16>
    %14 = vector.shape_cast %13 : vector<1x32x96xbf16> to vector<32x96xbf16>
    %cst = arith.constant dense<0.000000e+00> : vector<8x96xf32>
    %15 = tpu.matmul %12, %14, %cst {dimension_numbers = #tpu.dot_dimension_numbers<[1], [0], [0], [1], [0, 0, 1, 1], [], []>} : vector<8x32xbf16>, vector<32x96xbf16>, vector<8x96xf32> -> vector<8x96xf32>
    %c0_8 = arith.constant 0 : index
    %c0_9 = arith.constant 0 : index
    %c0_10 = arith.constant 0 : index
    %16 = vector.load %arg4[%c0_8, %c0_9, %c0_10] : memref<1x1x96xf32, #tpu.memory_space<vmem>>, vector<1x1x96xf32>
    %17 = vector.shape_cast %16 : vector<1x1x96xf32> to vector<1x96xf32>
    %18 = vector.broadcast %17 : vector<1x96xf32> to vector<8x96xf32>
    %19 = arith.addf %15, %18 : vector<8x96xf32>
    %cst_11 = arith.constant 0.000000e+00 : f32
    %20 = vector.broadcast %cst_11 : f32 to vector<8x32xf32>
    %21 = vector.extract_strided_slice %19 {offsets = [0, 0], sizes = [8, 8], strides = [1, 1]} : vector<8x96xf32> to vector<8x8xf32>
    %22 = arith.truncf %21 : vector<8x8xf32> to vector<8x8xbf16>
    %23 = vector.extract_strided_slice %19 {offsets = [0, 32], sizes = [8, 8], strides = [1, 1]} : vector<8x96xf32> to vector<8x8xf32>
    %24 = arith.truncf %23 : vector<8x8xf32> to vector<8x8xbf16>
    %25 = vector.extract_strided_slice %19 {offsets = [0, 64], sizes = [8, 8], strides = [1, 1]} : vector<8x96xf32> to vector<8x8xf32>
    %26 = arith.truncf %25 : vector<8x8xf32> to vector<8x8xbf16>
    %cst_12 = arith.constant dense<0.000000e+00> : vector<8x8xf32>
    %27 = tpu.matmul %22, %24, %cst_12 {dimension_numbers = #tpu.dot_dimension_numbers<[1], [1], [0], [0], [0, 0, 1, 0], [], []>} : vector<8x8xbf16>, vector<8x8xbf16>, vector<8x8xf32> -> vector<8x8xf32>
    %cst_13 = arith.constant dense<0xFF800000> : vector<8xf32>
    %28 = vector.multi_reduction <maximumf>, %27, %cst_13 [1] : vector<8x8xf32> to vector<8xf32>
    %29 = vector.shape_cast %28 : vector<8xf32> to vector<8x1xf32>
    %30 = vector.broadcast %29 : vector<8x1xf32> to vector<8x8xf32>
    %31 = arith.subf %27, %30 : vector<8x8xf32>
    %32 = math.exp %31 : vector<8x8xf32>
    %cst_14 = arith.constant dense<0.000000e+00> : vector<8xf32>
    %33 = vector.multi_reduction <add>, %32, %cst_14 [1] : vector<8x8xf32> to vector<8xf32>
    %34 = vector.shape_cast %33 : vector<8xf32> to vector<8x1xf32>
    %35 = tpu.reciprocal %34 {approx = true} : vector<8x1xf32> -> vector<8x1xf32>
    %36 = vector.broadcast %35 : vector<8x1xf32> to vector<8x8xf32>
    %37 = arith.mulf %32, %36 : vector<8x8xf32>
    %38 = arith.truncf %37 : vector<8x8xf32> to vector<8x8xbf16>
    %cst_15 = arith.constant dense<0.000000e+00> : vector<8x8xf32>
    %39 = tpu.matmul %38, %26, %cst_15 {dimension_numbers = #tpu.dot_dimension_numbers<[1], [0], [0], [1], [0, 0, 1, 1], [], []>} : vector<8x8xbf16>, vector<8x8xbf16>, vector<8x8xf32> -> vector<8x8xf32>
    %40 = arith.truncf %39 : vector<8x8xf32> to vector<8x8xbf16>
    %c0_16 = arith.constant 0 : index
    %c0_17 = arith.constant 0 : index
    %c0_18 = arith.constant 0 : index
    %c0_19 = arith.constant 0 : index
    %41 = vector.load %arg5[%c0_16, %c0_17, %c0_18, %c0_19] : memref<1x4x8x32xbf16, #tpu.memory_space<vmem>>, vector<1x1x8x32xbf16>
    %42 = vector.shape_cast %41 : vector<1x1x8x32xbf16> to vector<8x32xbf16>
    %cst_20 = arith.constant dense<0.000000e+00> : vector<8x32xf32>
    %43 = tpu.matmul %40, %42, %cst_20 {dimension_numbers = #tpu.dot_dimension_numbers<[1], [0], [0], [1], [0, 0, 1, 1], [], []>} : vector<8x8xbf16>, vector<8x32xbf16>, vector<8x32xf32> -> vector<8x32xf32>
    %44 = arith.addf %20, %43 : vector<8x32xf32>
    %45 = vector.extract_strided_slice %19 {offsets = [0, 8], sizes = [8, 8], strides = [1, 1]} : vector<8x96xf32> to vector<8x8xf32>
    %46 = arith.truncf %45 : vector<8x8xf32> to vector<8x8xbf16>
    %47 = vector.extract_strided_slice %19 {offsets = [0, 40], sizes = [8, 8], strides = [1, 1]} : vector<8x96xf32> to vector<8x8xf32>
    %48 = arith.truncf %47 : vector<8x8xf32> to vector<8x8xbf16>
    %49 = vector.extract_strided_slice %19 {offsets = [0, 72], sizes = [8, 8], strides = [1, 1]} : vector<8x96xf32> to vector<8x8xf32>
    %50 = arith.truncf %49 : vector<8x8xf32> to vector<8x8xbf16>
    %cst_21 = arith.constant dense<0.000000e+00> : vector<8x8xf32>
    %51 = tpu.matmul %46, %48, %cst_21 {dimension_numbers = #tpu.dot_dimension_numbers<[1], [1], [0], [0], [0, 0, 1, 0], [], []>} : vector<8x8xbf16>, vector<8x8xbf16>, vector<8x8xf32> -> vector<8x8xf32>
    %cst_22 = arith.constant dense<0xFF800000> : vector<8xf32>
    %52 = vector.multi_reduction <maximumf>, %51, %cst_22 [1] : vector<8x8xf32> to vector<8xf32>
    %53 = vector.shape_cast %52 : vector<8xf32> to vector<8x1xf32>
    %54 = vector.broadcast %53 : vector<8x1xf32> to vector<8x8xf32>
    %55 = arith.subf %51, %54 : vector<8x8xf32>
    %56 = math.exp %55 : vector<8x8xf32>
    %cst_23 = arith.constant dense<0.000000e+00> : vector<8xf32>
    %57 = vector.multi_reduction <add>, %56, %cst_23 [1] : vector<8x8xf32> to vector<8xf32>
    %58 = vector.shape_cast %57 : vector<8xf32> to vector<8x1xf32>
    %59 = tpu.reciprocal %58 {approx = true} : vector<8x1xf32> -> vector<8x1xf32>
    %60 = vector.broadcast %59 : vector<8x1xf32> to vector<8x8xf32>
    %61 = arith.mulf %56, %60 : vector<8x8xf32>
    %62 = arith.truncf %61 : vector<8x8xf32> to vector<8x8xbf16>
    %cst_24 = arith.constant dense<0.000000e+00> : vector<8x8xf32>
    %63 = tpu.matmul %62, %50, %cst_24 {dimension_numbers = #tpu.dot_dimension_numbers<[1], [0], [0], [1], [0, 0, 1, 1], [], []>} : vector<8x8xbf16>, vector<8x8xbf16>, vector<8x8xf32> -> vector<8x8xf32>
    %64 = arith.truncf %63 : vector<8x8xf32> to vector<8x8xbf16>
    %c0_25 = arith.constant 0 : index
    %c1 = arith.constant 1 : index
    %c0_26 = arith.constant 0 : index
    %c0_27 = arith.constant 0 : index
    %65 = vector.load %arg5[%c0_25, %c1, %c0_26, %c0_27] : memref<1x4x8x32xbf16, #tpu.memory_space<vmem>>, vector<1x1x8x32xbf16>
    %66 = vector.shape_cast %65 : vector<1x1x8x32xbf16> to vector<8x32xbf16>
    %cst_28 = arith.constant dense<0.000000e+00> : vector<8x32xf32>
    %67 = tpu.matmul %64, %66, %cst_28 {dimension_numbers = #tpu.dot_dimension_numbers<[1], [0], [0], [1], [0, 0, 1, 1], [], []>} : vector<8x8xbf16>, vector<8x32xbf16>, vector<8x32xf32> -> vector<8x32xf32>
    %68 = arith.addf %44, %67 : vector<8x32xf32>
    %69 = vector.extract_strided_slice %19 {offsets = [0, 16], sizes = [8, 8], strides = [1, 1]} : vector<8x96xf32> to vector<8x8xf32>
    %70 = arith.truncf %69 : vector<8x8xf32> to vector<8x8xbf16>
    %71 = vector.extract_strided_slice %19 {offsets = [0, 48], sizes = [8, 8], strides = [1, 1]} : vector<8x96xf32> to vector<8x8xf32>
    %72 = arith.truncf %71 : vector<8x8xf32> to vector<8x8xbf16>
    %73 = vector.extract_strided_slice %19 {offsets = [0, 80], sizes = [8, 8], strides = [1, 1]} : vector<8x96xf32> to vector<8x8xf32>
    %74 = arith.truncf %73 : vector<8x8xf32> to vector<8x8xbf16>
    %cst_29 = arith.constant dense<0.000000e+00> : vector<8x8xf32>
    %75 = tpu.matmul %70, %72, %cst_29 {dimension_numbers = #tpu.dot_dimension_numbers<[1], [1], [0], [0], [0, 0, 1, 0], [], []>} : vector<8x8xbf16>, vector<8x8xbf16>, vector<8x8xf32> -> vector<8x8xf32>
    %cst_30 = arith.constant dense<0xFF800000> : vector<8xf32>
    %76 = vector.multi_reduction <maximumf>, %75, %cst_30 [1] : vector<8x8xf32> to vector<8xf32>
    %77 = vector.shape_cast %76 : vector<8xf32> to vector<8x1xf32>
    %78 = vector.broadcast %77 : vector<8x1xf32> to vector<8x8xf32>
    %79 = arith.subf %75, %78 : vector<8x8xf32>
    %80 = math.exp %79 : vector<8x8xf32>
    %cst_31 = arith.constant dense<0.000000e+00> : vector<8xf32>
    %81 = vector.multi_reduction <add>, %80, %cst_31 [1] : vector<8x8xf32> to vector<8xf32>
    %82 = vector.shape_cast %81 : vector<8xf32> to vector<8x1xf32>
    %83 = tpu.reciprocal %82 {approx = true} : vector<8x1xf32> -> vector<8x1xf32>
    %84 = vector.broadcast %83 : vector<8x1xf32> to vector<8x8xf32>
    %85 = arith.mulf %80, %84 : vector<8x8xf32>
    %86 = arith.truncf %85 : vector<8x8xf32> to vector<8x8xbf16>
    %cst_32 = arith.constant dense<0.000000e+00> : vector<8x8xf32>
    %87 = tpu.matmul %86, %74, %cst_32 {dimension_numbers = #tpu.dot_dimension_numbers<[1], [0], [0], [1], [0, 0, 1, 1], [], []>} : vector<8x8xbf16>, vector<8x8xbf16>, vector<8x8xf32> -> vector<8x8xf32>
    %88 = arith.truncf %87 : vector<8x8xf32> to vector<8x8xbf16>
    %c0_33 = arith.constant 0 : index
    %c2 = arith.constant 2 : index
    %c0_34 = arith.constant 0 : index
    %c0_35 = arith.constant 0 : index
    %89 = vector.load %arg5[%c0_33, %c2, %c0_34, %c0_35] : memref<1x4x8x32xbf16, #tpu.memory_space<vmem>>, vector<1x1x8x32xbf16>
    %90 = vector.shape_cast %89 : vector<1x1x8x32xbf16> to vector<8x32xbf16>
    %cst_36 = arith.constant dense<0.000000e+00> : vector<8x32xf32>
    %91 = tpu.matmul %88, %90, %cst_36 {dimension_numbers = #tpu.dot_dimension_numbers<[1], [0], [0], [1], [0, 0, 1, 1], [], []>} : vector<8x8xbf16>, vector<8x32xbf16>, vector<8x32xf32> -> vector<8x32xf32>
    %92 = arith.addf %68, %91 : vector<8x32xf32>
    %93 = vector.extract_strided_slice %19 {offsets = [0, 24], sizes = [8, 8], strides = [1, 1]} : vector<8x96xf32> to vector<8x8xf32>
    %94 = arith.truncf %93 : vector<8x8xf32> to vector<8x8xbf16>
    %95 = vector.extract_strided_slice %19 {offsets = [0, 56], sizes = [8, 8], strides = [1, 1]} : vector<8x96xf32> to vector<8x8xf32>
    %96 = arith.truncf %95 : vector<8x8xf32> to vector<8x8xbf16>
    %97 = vector.extract_strided_slice %19 {offsets = [0, 88], sizes = [8, 8], strides = [1, 1]} : vector<8x96xf32> to vector<8x8xf32>
    %98 = arith.truncf %97 : vector<8x8xf32> to vector<8x8xbf16>
    %cst_37 = arith.constant dense<0.000000e+00> : vector<8x8xf32>
    %99 = tpu.matmul %94, %96, %cst_37 {dimension_numbers = #tpu.dot_dimension_numbers<[1], [1], [0], [0], [0, 0, 1, 0], [], []>} : vector<8x8xbf16>, vector<8x8xbf16>, vector<8x8xf32> -> vector<8x8xf32>
    %cst_38 = arith.constant dense<0xFF800000> : vector<8xf32>
    %100 = vector.multi_reduction <maximumf>, %99, %cst_38 [1] : vector<8x8xf32> to vector<8xf32>
    %101 = vector.shape_cast %100 : vector<8xf32> to vector<8x1xf32>
    %102 = vector.broadcast %101 : vector<8x1xf32> to vector<8x8xf32>
    %103 = arith.subf %99, %102 : vector<8x8xf32>
    %104 = math.exp %103 : vector<8x8xf32>
    %cst_39 = arith.constant dense<0.000000e+00> : vector<8xf32>
    %105 = vector.multi_reduction <add>, %104, %cst_39 [1] : vector<8x8xf32> to vector<8xf32>
    %106 = vector.shape_cast %105 : vector<8xf32> to vector<8x1xf32>
    %107 = tpu.reciprocal %106 {approx = true} : vector<8x1xf32> -> vector<8x1xf32>
    %108 = vector.broadcast %107 : vector<8x1xf32> to vector<8x8xf32>
    %109 = arith.mulf %104, %108 : vector<8x8xf32>
    %110 = arith.truncf %109 : vector<8x8xf32> to vector<8x8xbf16>
    %cst_40 = arith.constant dense<0.000000e+00> : vector<8x8xf32>
    %111 = tpu.matmul %110, %98, %cst_40 {dimension_numbers = #tpu.dot_dimension_numbers<[1], [0], [0], [1], [0, 0, 1, 1], [], []>} : vector<8x8xbf16>, vector<8x8xbf16>, vector<8x8xf32> -> vector<8x8xf32>
    %112 = arith.truncf %111 : vector<8x8xf32> to vector<8x8xbf16>
    %c0_41 = arith.constant 0 : index
    %c3 = arith.constant 3 : index
    %c0_42 = arith.constant 0 : index
    %c0_43 = arith.constant 0 : index
    %113 = vector.load %arg5[%c0_41, %c3, %c0_42, %c0_43] : memref<1x4x8x32xbf16, #tpu.memory_space<vmem>>, vector<1x1x8x32xbf16>
    %114 = vector.shape_cast %113 : vector<1x1x8x32xbf16> to vector<8x32xbf16>
    %cst_44 = arith.constant dense<0.000000e+00> : vector<8x32xf32>
    %115 = tpu.matmul %112, %114, %cst_44 {dimension_numbers = #tpu.dot_dimension_numbers<[1], [0], [0], [1], [0, 0, 1, 1], [], []>} : vector<8x8xbf16>, vector<8x32xbf16>, vector<8x32xf32> -> vector<8x32xf32>
    %116 = arith.addf %92, %115 : vector<8x32xf32>
    %117 = vector.broadcast %6 : vector<1x32xf32> to vector<8x32xf32>
    %118 = arith.addf %116, %117 : vector<8x32xf32>
    %119 = arith.addf %3, %118 : vector<8x32xf32>
    %cst_45 = arith.constant dense<0.000000e+00> : vector<8xf32>
    %120 = vector.multi_reduction <add>, %119, %cst_45 [1] : vector<8x32xf32> to vector<8xf32>
    %121 = vector.shape_cast %120 : vector<8xf32> to vector<8x1xf32>
    %cst_46 = arith.constant 3.200000e+01 : f32
    %122 = vector.broadcast %cst_46 : f32 to vector<8x1xf32>
    %123 = arith.divf %121, %122 : vector<8x1xf32>
    %124 = vector.broadcast %123 : vector<8x1xf32> to vector<8x32xf32>
    %125 = arith.subf %119, %124 : vector<8x32xf32>
    %126 = arith.mulf %125, %125 : vector<8x32xf32>
    %cst_47 = arith.constant dense<0.000000e+00> : vector<8xf32>
    %127 = vector.multi_reduction <add>, %126, %cst_47 [1] : vector<8x32xf32> to vector<8xf32>
    %128 = vector.shape_cast %127 : vector<8xf32> to vector<8x1xf32>
    %cst_48 = arith.constant 3.200000e+01 : f32
    %129 = vector.broadcast %cst_48 : f32 to vector<8x1xf32>
    %130 = arith.divf %128, %129 : vector<8x1xf32>
    %131 = vector.broadcast %123 : vector<8x1xf32> to vector<8x32xf32>
    %132 = arith.subf %119, %131 : vector<8x32xf32>
    %cst_49 = arith.constant 9.99999974E-6 : f32
    %133 = vector.broadcast %cst_49 : f32 to vector<8x1xf32>
    %134 = arith.addf %130, %133 : vector<8x1xf32>
    %135 = math.rsqrt %134 : vector<8x1xf32>
    %136 = vector.broadcast %135 : vector<8x1xf32> to vector<8x32xf32>
    %137 = arith.mulf %132, %136 : vector<8x32xf32>
    %138 = vector.broadcast %7 : vector<1x32xf32> to vector<8x32xf32>
    %139 = arith.mulf %137, %138 : vector<8x32xf32>
    %140 = vector.broadcast %8 : vector<1x32xf32> to vector<8x32xf32>
    %141 = arith.addf %139, %140 : vector<8x32xf32>
    %142 = arith.truncf %141 : vector<8x32xf32> to vector<8x32xbf16>
    %c0_50 = arith.constant 0 : index
    %c0_51 = arith.constant 0 : index
    %c0_52 = arith.constant 0 : index
    %143 = vector.load %arg6[%c0_50, %c0_51, %c0_52] : memref<1x32x32xbf16, #tpu.memory_space<vmem>>, vector<1x32x32xbf16>
    %144 = vector.shape_cast %143 : vector<1x32x32xbf16> to vector<32x32xbf16>
    %cst_53 = arith.constant dense<0.000000e+00> : vector<8x32xf32>
    %145 = tpu.matmul %142, %144, %cst_53 {dimension_numbers = #tpu.dot_dimension_numbers<[1], [0], [0], [1], [0, 0, 1, 1], [], []>} : vector<8x32xbf16>, vector<32x32xbf16>, vector<8x32xf32> -> vector<8x32xf32>
    %c0_54 = arith.constant 0 : index
    %c0_55 = arith.constant 0 : index
    %c0_56 = arith.constant 0 : index
    %146 = vector.load %arg7[%c0_54, %c0_55, %c0_56] : memref<1x1x32xf32, #tpu.memory_space<vmem>>, vector<1x1x32xf32>
    %147 = vector.shape_cast %146 : vector<1x1x32xf32> to vector<1x32xf32>
    %148 = vector.broadcast %147 : vector<1x32xf32> to vector<8x32xf32>
    %149 = arith.addf %145, %148 : vector<8x32xf32>
    %cst_57 = arith.constant 0.000000e+00 : f32
    %150 = vector.broadcast %cst_57 : f32 to vector<8x32xf32>
    %151 = arith.maximumf %149, %150 : vector<8x32xf32>
    %152 = arith.truncf %151 : vector<8x32xf32> to vector<8x32xbf16>
    %c0_58 = arith.constant 0 : index
    %c0_59 = arith.constant 0 : index
    %c0_60 = arith.constant 0 : index
    %153 = vector.load %arg8[%c0_58, %c0_59, %c0_60] : memref<1x32x32xbf16, #tpu.memory_space<vmem>>, vector<1x32x32xbf16>
    %154 = vector.shape_cast %153 : vector<1x32x32xbf16> to vector<32x32xbf16>
    %cst_61 = arith.constant dense<0.000000e+00> : vector<8x32xf32>
    %155 = tpu.matmul %152, %154, %cst_61 {dimension_numbers = #tpu.dot_dimension_numbers<[1], [0], [0], [1], [0, 0, 1, 1], [], []>} : vector<8x32xbf16>, vector<32x32xbf16>, vector<8x32xf32> -> vector<8x32xf32>
    %156 = vector.broadcast %9 : vector<1x32xf32> to vector<8x32xf32>
    %157 = arith.addf %155, %156 : vector<8x32xf32>
    %158 = arith.addf %141, %157 : vector<8x32xf32>
    %cst_62 = arith.constant dense<0.000000e+00> : vector<8xf32>
    %159 = vector.multi_reduction <add>, %158, %cst_62 [1] : vector<8x32xf32> to vector<8xf32>
    %160 = vector.shape_cast %159 : vector<8xf32> to vector<8x1xf32>
    %cst_63 = arith.constant 3.200000e+01 : f32
    %161 = vector.broadcast %cst_63 : f32 to vector<8x1xf32>
    %162 = arith.divf %160, %161 : vector<8x1xf32>
    %163 = vector.broadcast %162 : vector<8x1xf32> to vector<8x32xf32>
    %164 = arith.subf %158, %163 : vector<8x32xf32>
    %165 = arith.mulf %164, %164 : vector<8x32xf32>
    %cst_64 = arith.constant dense<0.000000e+00> : vector<8xf32>
    %166 = vector.multi_reduction <add>, %165, %cst_64 [1] : vector<8x32xf32> to vector<8xf32>
    %167 = vector.shape_cast %166 : vector<8xf32> to vector<8x1xf32>
    %cst_65 = arith.constant 3.200000e+01 : f32
    %168 = vector.broadcast %cst_65 : f32 to vector<8x1xf32>
    %169 = arith.divf %167, %168 : vector<8x1xf32>
    %170 = vector.broadcast %162 : vector<8x1xf32> to vector<8x32xf32>
    %171 = arith.subf %158, %170 : vector<8x32xf32>
    %cst_66 = arith.constant 9.99999974E-6 : f32
    %172 = vector.broadcast %cst_66 : f32 to vector<8x1xf32>
    %173 = arith.addf %169, %172 : vector<8x1xf32>
    %174 = math.rsqrt %173 : vector<8x1xf32>
    %175 = vector.broadcast %174 : vector<8x1xf32> to vector<8x32xf32>
    %176 = arith.mulf %171, %175 : vector<8x32xf32>
    %177 = vector.broadcast %10 : vector<1x32xf32> to vector<8x32xf32>
    %178 = arith.mulf %176, %177 : vector<8x32xf32>
    %179 = vector.broadcast %11 : vector<1x32xf32> to vector<8x32xf32>
    %180 = arith.addf %178, %179 : vector<8x32xf32>
    %c0_67 = arith.constant 0 : index
    %c0_68 = arith.constant 0 : index
    %c0_69 = arith.constant 0 : index
    %c0_70 = arith.constant 0 : index
    %181 = vector.load %arg12[%c0_67, %c0_68, %c0_69, %c0_70] : memref<1x1x8x32xf32, #tpu.memory_space<vmem>>, vector<1x1x8x32xf32>
    %182 = vector.shape_cast %181 : vector<1x1x8x32xf32> to vector<8x32xf32>
    %183 = vector.shape_cast %180 : vector<8x32xf32> to vector<1x1x8x32xf32>
    tpu.vector_store %arg12[%c0_67, %c0_68, %c0_69, %c0_70], %183 {strides = array<i32>} : memref<1x1x8x32xf32, #tpu.memory_space<vmem>>, vector<1x1x8x32xf32>,
    %c0_71 = arith.constant 0 : index
    %c0_72 = arith.constant 0 : index
    %184 = vector.load %arg14[%c0_71, %c0_72] : memref<8x32xf32, #tpu.memory_space<vmem>>, vector<8x32xf32>
    tpu.vector_store %arg14[%c0_71, %c0_72], %180 {strides = array<i32>} : memref<8x32xf32, #tpu.memory_space<vmem>>, vector<8x32xf32>,
    %c1_i32 = arith.constant 1 : i32
    %185 = arith.cmpi eq, %arg1, %c1_i32 : i32
    %186 = arith.extui %185 : i1 to i32
    %c0_i32_73 = arith.constant 0 : i32
    %187 = arith.cmpi ne, %186, %c0_i32_73 : i32
    scf.if %187 {
      %cst_74 = arith.constant dense<0xFF800000> : vector<32xf32>
      %188 = vector.multi_reduction <maximumf>, %180, %cst_74 [0] : vector<8x32xf32> to vector<32xf32>
      %189 = vector.shape_cast %188 : vector<32xf32> to vector<1x32xf32>
      %190 = arith.truncf %189 : vector<1x32xf32> to vector<1x32xbf16>
      %c0_75 = arith.constant 0 : index
      %c0_76 = arith.constant 0 : index
      %191 = vector.load %arg10[%c0_75, %c0_76] : memref<32x32xbf16, #tpu.memory_space<vmem>>, vector<32x32xbf16>
      %cst_77 = arith.constant dense<0.000000e+00> : vector<1x32xf32>
      %192 = tpu.matmul %190, %191, %cst_77 {dimension_numbers = #tpu.dot_dimension_numbers<[1], [0], [0], [1], [0, 0, 1, 1], [], []>} : vector<1x32xbf16>, vector<32x32xbf16>, vector<1x32xf32> -> vector<1x32xf32>
      %c0_78 = arith.constant 0 : index
      %c0_79 = arith.constant 0 : index
      %193 = vector.load %arg11[%c0_78, %c0_79] : memref<1x32xf32, #tpu.memory_space<vmem>>, vector<1x32xf32>
      %194 = arith.addf %192, %193 : vector<1x32xf32>
      %195 = math.tanh %194 : vector<1x32xf32>
      %c0_80 = arith.constant 0 : index
      %c0_81 = arith.constant 0 : index
      %c0_82 = arith.constant 0 : index
      %196 = vector.load %arg13[%c0_80, %c0_81, %c0_82] : memref<1x1x32xf32, #tpu.memory_space<vmem>>, vector<1x1x32xf32>
      %197 = vector.shape_cast %196 : vector<1x1x32xf32> to vector<1x32xf32>
      %198 = vector.shape_cast %195 : vector<1x32xf32> to vector<1x1x32xf32>
      tpu.vector_store %arg13[%c0_80, %c0_81, %c0_82], %198 {strides = array<i32>} : memref<1x1x32xf32, #tpu.memory_space<vmem>>, vector<1x1x32xf32>,
    } else {
    }
    return
  }
  func.func @transform_0(%arg0: i32, %arg1: i32) -> (i32, i32, i32) {
    %c0_i32 = arith.constant 0 : i32
    %c0_i32_0 = arith.constant 0 : i32
    %c0_i32_1 = arith.constant 0 : i32
    return %arg0, %c0_i32, %c0_i32_0 : i32, i32, i32
  }
  func.func @transform_1(%arg0: i32, %arg1: i32) -> (i32, i32, i32) {
    %c0_i32 = arith.constant 0 : i32
    %c0_i32_0 = arith.constant 0 : i32
    %c0_i32_1 = arith.constant 0 : i32
    return %arg1, %c0_i32, %c0_i32_0 : i32, i32, i32
  }
  func.func @transform_2(%arg0: i32, %arg1: i32) -> (i32, i32, i32) {
    %c0_i32 = arith.constant 0 : i32
    %c0_i32_0 = arith.constant 0 : i32
    %c0_i32_1 = arith.constant 0 : i32
    return %arg1, %c0_i32, %c0_i32_0 : i32, i32, i32
  }
  func.func @transform_3(%arg0: i32, %arg1: i32) -> (i32, i32, i32, i32) {
    %c0_i32 = arith.constant 0 : i32
    %c0_i32_0 = arith.constant 0 : i32
    %c0_i32_1 = arith.constant 0 : i32
    %c0_i32_2 = arith.constant 0 : i32
    return %arg1, %c0_i32, %c0_i32_0, %c0_i32_1 : i32, i32, i32, i32
  }
  func.func @transform_4(%arg0: i32, %arg1: i32) -> (i32, i32, i32) {
    %c0_i32 = arith.constant 0 : i32
    %c0_i32_0 = arith.constant 0 : i32
    %c0_i32_1 = arith.constant 0 : i32
    return %arg1, %c0_i32, %c0_i32_0 : i32, i32, i32
  }
  func.func @transform_5(%arg0: i32, %arg1: i32) -> (i32, i32, i32) {
    %c0_i32 = arith.constant 0 : i32
    %c0_i32_0 = arith.constant 0 : i32
    %c0_i32_1 = arith.constant 0 : i32
    return %arg1, %c0_i32, %c0_i32_0 : i32, i32, i32
  }
  func.func @transform_6(%arg0: i32, %arg1: i32) -> (i32, i32, i32) {
    %c0_i32 = arith.constant 0 : i32
    %c0_i32_0 = arith.constant 0 : i32
    %c0_i32_1 = arith.constant 0 : i32
    return %arg1, %c0_i32, %c0_i32_0 : i32, i32, i32
  }
  func.func @transform_7(%arg0: i32, %arg1: i32) -> (i32, i32, i32) {
    %c0_i32 = arith.constant 0 : i32
    %c0_i32_0 = arith.constant 0 : i32
    %c0_i32_1 = arith.constant 0 : i32
    return %arg1, %c0_i32, %c0_i32_0 : i32, i32, i32
  }
  func.func @transform_8(%arg0: i32, %arg1: i32) -> (i32, i32) {
    %c0_i32 = arith.constant 0 : i32
    %c0_i32_0 = arith.constant 0 : i32
    %c0_i32_1 = arith.constant 0 : i32
    return %c0_i32, %c0_i32_0 : i32, i32
  }
  func.func @transform_9(%arg0: i32, %arg1: i32) -> (i32, i32) {
    %c0_i32 = arith.constant 0 : i32
    %c0_i32_0 = arith.constant 0 : i32
    %c0_i32_1 = arith.constant 0 : i32
    return %c0_i32, %c0_i32_0 : i32, i32
  }
  func.func @transform_10(%arg0: i32, %arg1: i32) -> (i32, i32, i32, i32) {
    %c0_i32 = arith.constant 0 : i32
    %c0_i32_0 = arith.constant 0 : i32
    %c0_i32_1 = arith.constant 0 : i32
    return %arg1, %arg0, %c0_i32, %c0_i32_0 : i32, i32, i32, i32
  }
  func.func @transform_11(%arg0: i32, %arg1: i32) -> (i32, i32, i32) {
    %c0_i32 = arith.constant 0 : i32
    %c0_i32_0 = arith.constant 0 : i32
    %c0_i32_1 = arith.constant 0 : i32
    return %arg0, %c0_i32, %c0_i32_0 : i32, i32, i32
  }
}

</mosaic_0001>

<llo_original>
// kernel: transformer_encoder_forward.1
$region0: #{transformer_encoder_forward.1}
  #allocation0 [shape = 'u32[]', space=smem, size = 0x4, offset = 0x4, fixed_abs, tag = 'smem constant byte address 0x4 - core index']
  #allocation1 [shape = 'u32[144,128]{1,0:T(1,128)}', space=vmem, size = 0x12000, scoped, tag = 'internal scratch']
  #allocation2 [shape = 'f32[8,32]{1,0:T(8,128)}', space=vmem, size = 0x1000, scoped, tag = 'scratch operand']
  %s0 = inlined_call_operand.vmem [shape: f32[2,8,32], index: 0, kind: input, shape index: {}]
  %s1 = inlined_call_operand.vmem [shape: bf16[2,32,96], index: 1, kind: input, shape index: {}]
  %s2 = inlined_call_operand.vmem [shape: f32[2,1,96], index: 2, kind: input, shape index: {}]
  %s3 = inlined_call_operand.vmem [shape: bf16[2,4,8,32], index: 3, kind: input, shape index: {}]
  %s4 = inlined_call_operand.vmem [shape: bf16[2,32,32], index: 4, kind: input, shape index: {}]
  %s5 = inlined_call_operand.vmem [shape: f32[2,1,32], index: 5, kind: input, shape index: {}]
  %s6 = inlined_call_operand.vmem [shape: bf16[2,32,32], index: 6, kind: input, shape index: {}]
  %s7 = inlined_call_operand.vmem [shape: f32[2,6,32], index: 7, kind: input, shape index: {}]
  %s8 = inlined_call_operand.vmem [shape: bf16[32,32], index: 8, kind: input, shape index: {}]
  %s9 = inlined_call_operand.vmem [shape: f32[1,32], index: 9, kind: input, shape index: {}]
  %s10 = inlined_call_operand.hbm [shape: f32[2,2,8,32], index: 10, kind: output, shape index: {0}]
  %s11 = inlined_call_operand.hbm [shape: f32[2,1,32], index: 11, kind: output, shape index: {1}]
  %12 = xla_tuple %s10, %s11
  %s13 = sld [smem:[#allocation0]]
  $region89: #{transformer_encoder_forward.1} parent=0
    _
  %s15 = ssub.s32 1, %s13
  %s16 = scalar_select 0, %s15, %s13
  $region1: #{transformer_encoder_forward.1} parent=0
    #allocation3 [shape = 'u8[8192]{0}', space=vmem, size = 0x2000, scoped, tag = 'output window, operand 0']
    #allocation4 [shape = 's32[2]{0}', space=sflag, size = 0x8, scoped, tag = 'scoped memory for transformer_encoder_forward.1']
    #allocation5 [shape = 'u8[1024]{0}', space=vmem, size = 0x400, scoped, tag = 'output window, operand 1']
    #allocation6 [shape = 's32[2]{0}', space=sflag, size = 0x8, scoped, tag = 'scoped memory for transformer_encoder_forward.1']
    %17 = vsyncpa [#allocation4], 0
    %s18 = scalar_lea.sflag [#allocation4], 1
    %19 = vsyncpa %s18, 0
    %20 = vsyncpa [#allocation6], 0
    %s21 = scalar_lea.sflag [#allocation6], 1
    %22 = vsyncpa %s21, 0
    loop: start=0, step=1, limit=6
    $region2: #{transformer_encoder_forward.1} parent=1 // loop_pre_header
      _
    $region3: #{transformer_encoder_forward.1} parent=1 // loop_header
      %s24 = sphi 0, %s28
      %p25 = scmp.ge.s32.totalorder %s24, 6
      %s31 = sphi 0, %s43
      %s32 = sphi 0, %s39
      %s33 = sphi 0, %s31
      %s34 = sphi 0, %s32
      %s35 = sphi 0, %s33
      %s36 = sphi 0, %s34
      %s46 = sphi 0, %s48
      %s49 = sphi 0, %s46
      %s50 = sphi 0, %s49
      %s66 = sphi 0, %s50
      %s72 = sphi 0, %s74
      %s75 = sphi 0, %s72
      %s76 = sphi 0, %s75
      %s92 = sphi 0, %s76
      %s98 = sphi 0, %s100
      %s101 = sphi 0, %s98
      %s102 = sphi 0, %s101
      %s118 = sphi 0, %s102
      %s124 = sphi 0, %s126
      %s127 = sphi 0, %s124
      %s128 = sphi 0, %s127
      %s144 = sphi 0, %s128
      %s150 = sphi 0, %s152
      %s153 = sphi 0, %s150
      %s154 = sphi 0, %s153
      %s170 = sphi 0, %s154
      %s176 = sphi 0, %s178
      %s179 = sphi 0, %s176
      %s180 = sphi 0, %s179
      %s196 = sphi 0, %s180
      %s202 = sphi 0, %s204
      %s205 = sphi 0, %s202
      %s206 = sphi 0, %s205
      %s222 = sphi 0, %s206
      %s228 = sphi 0, %s230
      %s231 = sphi 0, %s228
      %s232 = sphi 0, %s231
      %s248 = sphi 0, %s232
      %s252 = sphi 0, %s252
      %s254 = sphi 0, %s252
      %s255 = sphi 0, %s254
      %s269 = sphi 0, %s255
      %s273 = sphi 0, %s273
      %s275 = sphi 0, %s273
      %s276 = sphi 0, %s275
      %s290 = sphi 0, %s276
      %s298 = sphi 0, %s300
      %s301 = sphi 0, %s298
      %s302 = sphi 0, %s301
      %s318 = sphi 0, %s302
      %s324 = sphi 0, %s326
      %s327 = sphi 0, %s324
      %s328 = sphi 0, %s327
      %s344 = sphi 0, %s328
    $region4: #{transformer_encoder_forward.1} parent=1 // loop_header_branch
      %27 = sbr.rel (%p25) target = $region8
    $region5: #{transformer_encoder_forward.1} parent=1 // loop_body
      %s29 = ssub.s32 %s24, 1
      %s30 = ssub.s32 %s24, 2
      %s37 = sadd.s32 1, %s32
      %p38 = scmp.ge.s32.totalorder %s37, 2
      %s39 = scalar_select %p38, 0, %s37
      %s40 = sadd.s32 1, %s31
      %s41 = scalar_select %p38, %s40, %s31
      %p42 = scmp.ge.s32.totalorder %s41, 2
      %s43 = scalar_select %p42, 0, %s41
      %s44 = ssub.s32 %s31, %s43
      %p45 = scmp.eq.s32.totalorder %s44, 0
      %s47 = sadd.s32 %s46, 1
      %s48 = scalar_select %p45, %s46, %s47
      %p51 = pneg %p45
      %p52 = scmp.eq.s32.totalorder %s24, 3
      %p53 = por %p51, %p52
      %p54 = scmp.ne.s32.totalorder %s46, %s49
      %p55 = scmp.eq.s32.totalorder %s24, 0
      %p56 = por %p54, %p55
      %p57 = scmp.ne.s32.totalorder %s46, %s49
      %p58 = scmp.eq.s32.totalorder %s29, 3
      %p59 = por %p57, %p58
      %p60 = scmp.ne.s32.totalorder %s49, %s50
      %p61 = scmp.eq.s32.totalorder %s29, 0
      %p62 = por %p60, %p61
      %p63 = scmp.ne.s32.totalorder %s49, %s50
      %p64 = scmp.eq.s32.totalorder %s30, 3
      %p65 = por %p63, %p64
      %p67 = scmp.ne.s32.totalorder %s50, %s66
      %p68 = scmp.eq.s32.totalorder %s30, 0
      %p69 = por %p67, %p68
      %s70 = ssub.s32 %s32, %s39
      %p71 = scmp.eq.s32.totalorder %s70, 0
      %s73 = sadd.s32 %s72, 1
      %s74 = scalar_select %p71, %s72, %s73
      %p77 = pneg %p71
      %p78 = scmp.eq.s32.totalorder %s24, 3
      %p79 = por %p77, %p78
      %p80 = scmp.ne.s32.totalorder %s72, %s75
      %p81 = scmp.eq.s32.totalorder %s24, 0
      %p82 = por %p80, %p81
      %p83 = scmp.ne.s32.totalorder %s72, %s75
      %p84 = scmp.eq.s32.totalorder %s29, 3
      %p85 = por %p83, %p84
      %p86 = scmp.ne.s32.totalorder %s75, %s76
      %p87 = scmp.eq.s32.totalorder %s29, 0
      %p88 = por %p86, %p87
      %p89 = scmp.ne.s32.totalorder %s75, %s76
      %p90 = scmp.eq.s32.totalorder %s30, 3
      %p91 = por %p89, %p90
      %p93 = scmp.ne.s32.totalorder %s76, %s92
      %p94 = scmp.eq.s32.totalorder %s30, 0
      %p95 = por %p93, %p94
      %s96 = ssub.s32 %s32, %s39
      %p97 = scmp.eq.s32.totalorder %s96, 0
      %s99 = sadd.s32 %s98, 1
      %s100 = scalar_select %p97, %s98, %s99
      %p103 = pneg %p97
      %p104 = scmp.eq.s32.totalorder %s24, 3
      %p105 = por %p103, %p104
      %p106 = scmp.ne.s32.totalorder %s98, %s101
      %p107 = scmp.eq.s32.totalorder %s24, 0
      %p108 = por %p106, %p107
      %p109 = scmp.ne.s32.totalorder %s98, %s101
      %p110 = scmp.eq.s32.totalorder %s29, 3
      %p111 = por %p109, %p110
      %p112 = scmp.ne.s32.totalorder %s101, %s102
      %p113 = scmp.eq.s32.totalorder %s29, 0
      %p114 = por %p112, %p113
      %p115 = scmp.ne.s32.totalorder %s101, %s102
      %p116 = scmp.eq.s32.totalorder %s30, 3
      %p117 = por %p115, %p116
      %p119 = scmp.ne.s32.totalorder %s102, %s118
      %p120 = scmp.eq.s32.totalorder %s30, 0
      %p121 = por %p119, %p120
      %s122 = ssub.s32 %s32, %s39
      %p123 = scmp.eq.s32.totalorder %s122, 0
      %s125 = sadd.s32 %s124, 1
      %s126 = scalar_select %p123, %s124, %s125
      %p129 = pneg %p123
      %p130 = scmp.eq.s32.totalorder %s24, 3
      %p131 = por %p129, %p130
      %p132 = scmp.ne.s32.totalorder %s124, %s127
      %p133 = scmp.eq.s32.totalorder %s24, 0
      %p134 = por %p132, %p133
      %p135 = scmp.ne.s32.totalorder %s124, %s127
      %p136 = scmp.eq.s32.totalorder %s29, 3
      %p137 = por %p135, %p136
      %p138 = scmp.ne.s32.totalorder %s127, %s128
      %p139 = scmp.eq.s32.totalorder %s29, 0
      %p140 = por %p138, %p139
      %p141 = scmp.ne.s32.totalorder %s127, %s128
      %p142 = scmp.eq.s32.totalorder %s30, 3
      %p143 = por %p141, %p142
      %p145 = scmp.ne.s32.totalorder %s128, %s144
      %p146 = scmp.eq.s32.totalorder %s30, 0
      %p147 = por %p145, %p146
      %s148 = ssub.s32 %s32, %s39
      %p149 = scmp.eq.s32.totalorder %s148, 0
      %s151 = sadd.s32 %s150, 1
      %s152 = scalar_select %p149, %s150, %s151
      %p155 = pneg %p149
      %p156 = scmp.eq.s32.totalorder %s24, 3
      %p157 = por %p155, %p156
      %p158 = scmp.ne.s32.totalorder %s150, %s153
      %p159 = scmp.eq.s32.totalorder %s24, 0
      %p160 = por %p158, %p159
      %p161 = scmp.ne.s32.totalorder %s150, %s153
      %p162 = scmp.eq.s32.totalorder %s29, 3
      %p163 = por %p161, %p162
      %p164 = scmp.ne.s32.totalorder %s153, %s154
      %p165 = scmp.eq.s32.totalorder %s29, 0
      %p166 = por %p164, %p165
      %p167 = scmp.ne.s32.totalorder %s153, %s154
      %p168 = scmp.eq.s32.totalorder %s30, 3
      %p169 = por %p167, %p168
      %p171 = scmp.ne.s32.totalorder %s154, %s170
      %p172 = scmp.eq.s32.totalorder %s30, 0
      %p173 = por %p171, %p172
      %s174 = ssub.s32 %s32, %s39
      %p175 = scmp.eq.s32.totalorder %s174, 0
      %s177 = sadd.s32 %s176, 1
      %s178 = scalar_select %p175, %s176, %s177
      %p181 = pneg %p175
      %p182 = scmp.eq.s32.totalorder %s24, 3
      %p183 = por %p181, %p182
      %p184 = scmp.ne.s32.totalorder %s176, %s179
      %p185 = scmp.eq.s32.totalorder %s24, 0
      %p186 = por %p184, %p185
      %p187 = scmp.ne.s32.totalorder %s176, %s179
      %p188 = scmp.eq.s32.totalorder %s29, 3
      %p189 = por %p187, %p188
      %p190 = scmp.ne.s32.totalorder %s179, %s180
      %p191 = scmp.eq.s32.totalorder %s29, 0
      %p192 = por %p190, %p191
      %p193 = scmp.ne.s32.totalorder %s179, %s180
      %p194 = scmp.eq.s32.totalorder %s30, 3
      %p195 = por %p193, %p194
      %p197 = scmp.ne.s32.totalorder %s180, %s196
      %p198 = scmp.eq.s32.totalorder %s30, 0
      %p199 = por %p197, %p198
      %s200 = ssub.s32 %s32, %s39
      %p201 = scmp.eq.s32.totalorder %s200, 0
      %s203 = sadd.s32 %s202, 1
      %s204 = scalar_select %p201, %s202, %s203
      %p207 = pneg %p201
      %p208 = scmp.eq.s32.totalorder %s24, 3
      %p209 = por %p207, %p208
      %p210 = scmp.ne.s32.totalorder %s202, %s205
      %p211 = scmp.eq.s32.totalorder %s24, 0
      %p212 = por %p210, %p211
      %p213 = scmp.ne.s32.totalorder %s202, %s205
      %p214 = scmp.eq.s32.totalorder %s29, 3
      %p215 = por %p213, %p214
      %p216 = scmp.ne.s32.totalorder %s205, %s206
      %p217 = scmp.eq.s32.totalorder %s29, 0
      %p218 = por %p216, %p217
      %p219 = scmp.ne.s32.totalorder %s205, %s206
      %p220 = scmp.eq.s32.totalorder %s30, 3
      %p221 = por %p219, %p220
      %p223 = scmp.ne.s32.totalorder %s206, %s222
      %p224 = scmp.eq.s32.totalorder %s30, 0
      %p225 = por %p223, %p224
      %s226 = ssub.s32 %s32, %s39
      %p227 = scmp.eq.s32.totalorder %s226, 0
      %s229 = sadd.s32 %s228, 1
      %s230 = scalar_select %p227, %s228, %s229
      %p233 = pneg %p227
      %p234 = scmp.eq.s32.totalorder %s24, 3
      %p235 = por %p233, %p234
      %p236 = scmp.ne.s32.totalorder %s228, %s231
      %p237 = scmp.eq.s32.totalorder %s24, 0
      %p238 = por %p236, %p237
      %p239 = scmp.ne.s32.totalorder %s228, %s231
      %p240 = scmp.eq.s32.totalorder %s29, 3
      %p241 = por %p239, %p240
      %p242 = scmp.ne.s32.totalorder %s231, %s232
      %p243 = scmp.eq.s32.totalorder %s29, 0
      %p244 = por %p242, %p243
      %p245 = scmp.ne.s32.totalorder %s231, %s232
      %p246 = scmp.eq.s32.totalorder %s30, 3
      %p247 = por %p245, %p246
      %p249 = scmp.ne.s32.totalorder %s232, %s248
      %p250 = scmp.eq.s32.totalorder %s30, 0
      %p251 = por %p249, %p250
      %s253 = sadd.s32 %s252, 1
      %p256 = scmp.eq.s32.totalorder %s24, 3
      %p257 = scmp.ne.s32.totalorder %s252, %s254
      %p258 = scmp.eq.s32.totalorder %s24, 0
      %p259 = por %p257, %p258
      %p260 = scmp.ne.s32.totalorder %s252, %s254
      %p261 = scmp.eq.s32.totalorder %s29, 3
      %p262 = por %p260, %p261
      %p263 = scmp.ne.s32.totalorder %s254, %s255
      %p264 = scmp.eq.s32.totalorder %s29, 0
      %p265 = por %p263, %p264
      %p266 = scmp.ne.s32.totalorder %s254, %s255
      %p267 = scmp.eq.s32.totalorder %s30, 3
      %p268 = por %p266, %p267
      %p270 = scmp.ne.s32.totalorder %s255, %s269
      %p271 = scmp.eq.s32.totalorder %s30, 0
      %p272 = por %p270, %p271
      %s274 = sadd.s32 %s273, 1
      %p277 = scmp.eq.s32.totalorder %s24, 3
      %p278 = scmp.ne.s32.totalorder %s273, %s275
      %p279 = scmp.eq.s32.totalorder %s24, 0
      %p280 = por %p278, %p279
      %p281 = scmp.ne.s32.totalorder %s273, %s275
      %p282 = scmp.eq.s32.totalorder %s29, 3
      %p283 = por %p281, %p282
      %p284 = scmp.ne.s32.totalorder %s275, %s276
      %p285 = scmp.eq.s32.totalorder %s29, 0
      %p286 = por %p284, %p285
      %p287 = scmp.ne.s32.totalorder %s275, %s276
      %p288 = scmp.eq.s32.totalorder %s30, 3
      %p289 = por %p287, %p288
      %p291 = scmp.ne.s32.totalorder %s276, %s290
      %p292 = scmp.eq.s32.totalorder %s30, 0
      %p293 = por %p291, %p292
      %s294 = ssub.s32 %s32, %s39
      %s295 = ssub.s32 %s31, %s43
      %s296 = sor.u32 %s294, %s295
      %p297 = scmp.eq.s32.totalorder %s296, 0
      %s299 = sadd.s32 %s298, 1
      %s300 = scalar_select %p297, %s298, %s299
      %p303 = pneg %p297
      %p304 = scmp.eq.s32.totalorder %s24, 3
      %p305 = por %p303, %p304
      %p306 = scmp.ne.s32.totalorder %s298, %s301
      %p307 = scmp.eq.s32.totalorder %s24, 0
      %p308 = por %p306, %p307
      %p309 = scmp.ne.s32.totalorder %s298, %s301
      %p310 = scmp.eq.s32.totalorder %s29, 3
      %p311 = por %p309, %p310
      %p312 = scmp.ne.s32.totalorder %s301, %s302
      %p313 = scmp.eq.s32.totalorder %s29, 0
      %p314 = por %p312, %p313
      %p315 = scmp.ne.s32.totalorder %s301, %s302
      %p316 = scmp.eq.s32.totalorder %s30, 3
      %p317 = por %p315, %p316
      %p319 = scmp.ne.s32.totalorder %s302, %s318
      %p320 = scmp.eq.s32.totalorder %s30, 0
      %p321 = por %p319, %p320
      %s322 = ssub.s32 %s31, %s43
      %p323 = scmp.eq.s32.totalorder %s322, 0
      %s325 = sadd.s32 %s324, 1
      %s326 = scalar_select %p323, %s324, %s325
      %p329 = pneg %p323
      %p330 = scmp.eq.s32.totalorder %s24, 3
      %p331 = por %p329, %p330
      %p332 = scmp.ne.s32.totalorder %s324, %s327
      %p333 = scmp.eq.s32.totalorder %s24, 0
      %p334 = por %p332, %p333
      %p335 = scmp.ne.s32.totalorder %s324, %s327
      %p336 = scmp.eq.s32.totalorder %s29, 3
      %p337 = por %p335, %p336
      %p338 = scmp.ne.s32.totalorder %s327, %s328
      %p339 = scmp.eq.s32.totalorder %s29, 0
      %p340 = por %p338, %p339
      %p341 = scmp.ne.s32.totalorder %s327, %s328
      %p342 = scmp.eq.s32.totalorder %s30, 3
      %p343 = por %p341, %p342
      %p345 = scmp.ne.s32.totalorder %s328, %s344
      %p346 = scmp.eq.s32.totalorder %s30, 0
      %p347 = por %p345, %p346
      %p348 = scmp.le.s32.totalorder 1, %s24
      %p349 = scmp.lt.s32.totalorder %s24, 5
      %p350 = pnand %p348, %p349
      %p351 = pneg %p350
      // Predicated region
      $region9: #{transformer_encoder_forward.1} parent=5 // pred_check
        _
      $region10: #{transformer_encoder_forward.1} parent=5 // pred_check_branch
        %353 = sbr.rel (%p350) target = $region12
      $region11: #{transformer_encoder_forward.1} parent=5 // pred_region
        %s354 = ssub.s32 %s24, 1
        // Predicated region
        $region13: #{transformer_encoder_forward.1} parent=11 // pred_check
          %p355 = pneg %p265
        $region14: #{transformer_encoder_forward.1} parent=11 // pred_check_branch
          %357 = sbr.rel (%p355) target = $region16
        $region15: #{transformer_encoder_forward.1} parent=11 // pred_region
          _
        $region16: #{transformer_encoder_forward.1} parent=11 // pred_fallthru
          _
        // Predicated region
        $region17: #{transformer_encoder_forward.1} parent=11 // pred_check
          %p358 = pneg %p286
        $region18: #{transformer_encoder_forward.1} parent=11 // pred_check_branch
          %360 = sbr.rel (%p358) target = $region20
        $region19: #{transformer_encoder_forward.1} parent=11 // pred_region
          _
        $region20: #{transformer_encoder_forward.1} parent=11 // pred_fallthru
          _
      $region12: #{transformer_encoder_forward.1} parent=5 // pred_fallthru
        _
      %p361 = scmp.lt.s32.totalorder %s24, 4
      // Predicated region
      $region21: #{transformer_encoder_forward.1} parent=5 // pred_check
        %p362 = pneg %p361
      $region22: #{transformer_encoder_forward.1} parent=5 // pred_check_branch
        %364 = sbr.rel (%p362) target = $region24
      $region23: #{transformer_encoder_forward.1} parent=5 // pred_region
        // Predicated region
        $region25: #{transformer_encoder_forward.1} parent=23 // pred_check
          %p365 = pneg %p56
        $region26: #{transformer_encoder_forward.1} parent=23 // pred_check_branch
          %367 = sbr.rel (%p365) target = $region28
        $region27: #{transformer_encoder_forward.1} parent=23 // pred_region
          %p368 = scmp.lt.s32.totalorder %s31, 1
          %s369 = scalar_select %p368, %s31, 1
          %s370 = smul.addr %s369, 8
          %s371 = scalar_lea.vmem %s0, %s370
        $region28: #{transformer_encoder_forward.1} parent=23 // pred_fallthru
          _
        // Predicated region
        $region29: #{transformer_encoder_forward.1} parent=23 // pred_check
          %p372 = pneg %p82
        $region30: #{transformer_encoder_forward.1} parent=23 // pred_check_branch
          %374 = sbr.rel (%p372) target = $region32
        $region31: #{transformer_encoder_forward.1} parent=23 // pred_region
          %p375 = scmp.lt.s32.totalorder %s32, 1
          %s376 = scalar_select %p375, %s32, 1
          %s377 = smul.addr %s376, 4
          %s378 = smul.addr %s377, 4
          %s379 = scalar_lea.vmem %s1, %s378
        $region32: #{transformer_encoder_forward.1} parent=23 // pred_fallthru
          _
        // Predicated region
        $region33: #{transformer_encoder_forward.1} parent=23 // pred_check
          %p380 = pneg %p108
        $region34: #{transformer_encoder_forward.1} parent=23 // pred_check_branch
          %382 = sbr.rel (%p380) target = $region36
        $region35: #{transformer_encoder_forward.1} parent=23 // pred_region
          %p383 = scmp.lt.s32.totalorder %s32, 1
          %s384 = scalar_select %p383, %s32, 1
          %s385 = scalar_lea.vmem %s2, %s384
        $region36: #{transformer_encoder_forward.1} parent=23 // pred_fallthru
          _
        // Predicated region
        $region37: #{transformer_encoder_forward.1} parent=23 // pred_check
          %p386 = pneg %p134
        $region38: #{transformer_encoder_forward.1} parent=23 // pred_check_branch
          %388 = sbr.rel (%p386) target = $region40
        $region39: #{transformer_encoder_forward.1} parent=23 // pred_region
          %p389 = scmp.lt.s32.totalorder %s32, 1
          %s390 = scalar_select %p389, %s32, 1
          %s391 = smul.addr %s390, 4
          %s392 = smul.addr %s391, 4
          %s393 = scalar_lea.vmem %s3, %s392
        $region40: #{transformer_encoder_forward.1} parent=23 // pred_fallthru
          _
        // Predicated region
        $region41: #{transformer_encoder_forward.1} parent=23 // pred_check
          %p394 = pneg %p160
        $region42: #{transformer_encoder_forward.1} parent=23 // pred_check_branch
          %396 = sbr.rel (%p394) target = $region44
        $region43: #{transformer_encoder_forward.1} parent=23 // pred_region
          %p397 = scmp.lt.s32.totalorder %s32, 1
          %s398 = scalar_select %p397, %s32, 1
          %s399 = smul.addr %s398, 4
          %s400 = smul.addr %s399, 4
          %s401 = scalar_lea.vmem %s4, %s400
        $region44: #{transformer_encoder_forward.1} parent=23 // pred_fallthru
          _
        // Predicated region
        $region45: #{transformer_encoder_forward.1} parent=23 // pred_check
          %p402 = pneg %p186
        $region46: #{transformer_encoder_forward.1} parent=23 // pred_check_branch
          %404 = sbr.rel (%p402) target = $region48
        $region47: #{transformer_encoder_forward.1} parent=23 // pred_region
          %p405 = scmp.lt.s32.totalorder %s32, 1
          %s406 = scalar_select %p405, %s32, 1
          %s407 = scalar_lea.vmem %s5, %s406
        $region48: #{transformer_encoder_forward.1} parent=23 // pred_fallthru
          _
        // Predicated region
        $region49: #{transformer_encoder_forward.1} parent=23 // pred_check
          %p408 = pneg %p212
        $region50: #{transformer_encoder_forward.1} parent=23 // pred_check_branch
          %410 = sbr.rel (%p408) target = $region52
        $region51: #{transformer_encoder_forward.1} parent=23 // pred_region
          %p411 = scmp.lt.s32.totalorder %s32, 1
          %s412 = scalar_select %p411, %s32, 1
          %s413 = smul.addr %s412, 4
          %s414 = smul.addr %s413, 4
          %s415 = scalar_lea.vmem %s6, %s414
        $region52: #{transformer_encoder_forward.1} parent=23 // pred_fallthru
          _
        // Predicated region
        $region53: #{transformer_encoder_forward.1} parent=23 // pred_check
          %p416 = pneg %p238
        $region54: #{transformer_encoder_forward.1} parent=23 // pred_check_branch
          %418 = sbr.rel (%p416) target = $region56
        $region55: #{transformer_encoder_forward.1} parent=23 // pred_region
          %p419 = scmp.lt.s32.totalorder %s32, 1
          %s420 = scalar_select %p419, %s32, 1
          %s421 = smul.addr %s420, 8
          %s422 = scalar_lea.vmem %s7, %s421
        $region56: #{transformer_encoder_forward.1} parent=23 // pred_fallthru
          _
      $region24: #{transformer_encoder_forward.1} parent=5 // pred_fallthru
        _
      %p423 = scmp.le.s32.totalorder 1, %s24
      %p424 = scmp.lt.s32.totalorder %s24, 5
      %p425 = pnand %p423, %p424
      %p426 = pneg %p425
      // Predicated region
      $region57: #{transformer_encoder_forward.1} parent=5 // pred_check
        _
      $region58: #{transformer_encoder_forward.1} parent=5 // pred_check_branch
        %428 = sbr.rel (%p425) target = $region60
      $region59: #{transformer_encoder_forward.1} parent=5 // pred_region
        %s429 = ssub.s32 %s24, 1
        %p430 = scmp.lt.s32.totalorder %s33, 1
        %s431 = scalar_select %p430, %s33, 1
        %s432 = smul.addr %s431, 8
        %s433 = scalar_lea.vmem %s0, %s432
        %p434 = pneg %p62
        %p435 = pneg %p59
        %p436 = scmp.lt.s32.totalorder %s34, 1
        %s437 = scalar_select %p436, %s34, 1
        %s438 = smul.addr %s437, 4
        %s439 = smul.addr %s438, 4
        %s440 = scalar_lea.vmem %s1, %s439
        %p441 = pneg %p88
        %p442 = pneg %p85
        %p443 = scmp.lt.s32.totalorder %s34, 1
        %s444 = scalar_select %p443, %s34, 1
        %s445 = scalar_lea.vmem %s2, %s444
        %p446 = pneg %p114
        %p447 = pneg %p111
        %p448 = scmp.lt.s32.totalorder %s34, 1
        %s449 = scalar_select %p448, %s34, 1
        %s450 = smul.addr %s449, 4
        %s451 = smul.addr %s450, 4
        %s452 = scalar_lea.vmem %s3, %s451
        %p453 = pneg %p140
        %p454 = pneg %p137
        %p455 = scmp.lt.s32.totalorder %s34, 1
        %s456 = scalar_select %p455, %s34, 1
        %s457 = smul.addr %s456, 4
        %s458 = smul.addr %s457, 4
        %s459 = scalar_lea.vmem %s4, %s458
        %p460 = pneg %p166
        %p461 = pneg %p163
        %p462 = scmp.lt.s32.totalorder %s34, 1
        %s463 = scalar_select %p462, %s34, 1
        %s464 = scalar_lea.vmem %s5, %s463
        %p465 = pneg %p192
        %p466 = pneg %p189
        %p467 = scmp.lt.s32.totalorder %s34, 1
        %s468 = scalar_select %p467, %s34, 1
        %s469 = smul.addr %s468, 4
        %s470 = smul.addr %s469, 4
        %s471 = scalar_lea.vmem %s6, %s470
        %p472 = pneg %p218
        %p473 = pneg %p215
        %p474 = scmp.lt.s32.totalorder %s34, 1
        %s475 = scalar_select %p474, %s34, 1
        %s476 = smul.addr %s475, 8
        %s477 = scalar_lea.vmem %s7, %s476
        %p478 = pneg %p244
        %p479 = pneg %p241
        %p480 = pneg %p265
        %p481 = pneg %p262
        %p482 = pneg %p286
        %p483 = pneg %p283
        %p484 = pneg %p314
        %p485 = pneg %p311
        %s486 = sand.u32 %s301, 1
        %s487 = scalar_lea.sflag [#allocation4], %s486
        %s488 = sand.u32 %s301, 1
        %s489 = smul.addr %s488, 8
        %s490 = scalar_lea.vmem [#allocation3], %s489
        %p491 = pneg %p340
        %p492 = pneg %p337
        %s493 = sand.u32 %s327, 1
        %s494 = scalar_lea.sflag [#allocation6], %s493
        %s495 = sand.u32 %s327, 1
        %s496 = scalar_lea.vmem [#allocation5], %s495
        %p497 = scmp.lt.s32.totalorder %s33, 1
        %s498 = scalar_select %p497, %s33, 1
        %s499 = smul.addr %s498, 8
        %s500 = scalar_lea.vmem %s0, %s499
        %p501 = scmp.lt.s32.totalorder %s34, 1
        %s502 = scalar_select %p501, %s34, 1
        %s503 = smul.addr %s502, 4
        %s504 = smul.addr %s503, 4
        %s505 = scalar_lea.vmem %s1, %s504
        %p506 = scmp.lt.s32.totalorder %s34, 1
        %s507 = scalar_select %p506, %s34, 1
        %s508 = scalar_lea.vmem %s2, %s507
        %p509 = scmp.lt.s32.totalorder %s34, 1
        %s510 = scalar_select %p509, %s34, 1
        %s511 = smul.addr %s510, 4
        %s512 = smul.addr %s511, 4
        %s513 = scalar_lea.vmem %s3, %s512
        %p514 = scmp.lt.s32.totalorder %s34, 1
        %s515 = scalar_select %p514, %s34, 1
        %s516 = smul.addr %s515, 4
        %s517 = smul.addr %s516, 4
        %s518 = scalar_lea.vmem %s4, %s517
        %p519 = scmp.lt.s32.totalorder %s34, 1
        %s520 = scalar_select %p519, %s34, 1
        %s521 = scalar_lea.vmem %s5, %s520
        %p522 = scmp.lt.s32.totalorder %s34, 1
        %s523 = scalar_select %p522, %s34, 1
        %s524 = smul.addr %s523, 4
        %s525 = smul.addr %s524, 4
        %s526 = scalar_lea.vmem %s6, %s525
        %p527 = scmp.lt.s32.totalorder %s34, 1
        %s528 = scalar_select %p527, %s34, 1
        %s529 = smul.addr %s528, 8
        %s530 = scalar_lea.vmem %s7, %s529
        %p532 = scmp.eq.s32.totalorder %s34, 0
        // Predicated region
        $region61: #{transformer_encoder_forward.1} parent=59 // pred_check
          %p533 = pneg %p532
        $region62: #{transformer_encoder_forward.1} parent=59 // pred_check_branch
          %535 = sbr.rel (%p533) target = $region64
        $region63: #{transformer_encoder_forward.1} parent=59 // pred_region
          %v536 = vld [vmem:[%s500] sm:$0xff]
          %vm537 = vcmask 261120
          %538 = vst.msk [vmem:[#allocation2] sm:$0xff] %vm537, %v536
        $region64: #{transformer_encoder_forward.1} parent=59 // pred_fallthru
          _
        %v539 = vld [vmem:[#allocation2] sm:$0xff]
        %v540 = vld [vmem:[%s530] sm:$0x3f]
        %v541 = vpack.c.bf16 %v539, %v539
        %v542 = vld [vmem:[%s505] sm:$0xf]
        %v543 = vld [vmem:[%s505 + $0x4] sm:$0xf]
        %v544 = vld [vmem:[%s505 + $0x8] sm:$0xf]
        %v545 = vld [vmem:[%s505 + $0xc] sm:$0xf]
        %v546 = vld [vmem:[%s508] sm:$0x1]
        %v548 = vlaneseq
        %v549 = vshrl.u32 %v548, 7
        %v550 = vsub.s32 0, %v549
        %v551 = vrot.slane %v546, %v550
        %v557 = vunpack.c.l.b16 %v542
        %v558 = vunpack.c.l.b16 %v543
        %v559 = vunpack.c.l.b16 %v544
        %v560 = vunpack.c.l.b16 %v545
        %v561 = vpack.c.b16 %v558, %v557
        %v562 = vpack.c.b16 %v560, %v559
        %vm565 = vcmask 261120
        %v567 = vsel %vm565, %v541, 0
        %569 = vmatprep.subr.bf16.mxu0 0
        %570 = vmatpush1.bf16.msra.mxu0 %v561
        %571 = vmatprep.subr.bf16.mxu0 0
        %572 = vmatpush1.bf16.msra.mxu0 %v562
        %573 = vmatprep.subr.bf16.mxu0 0
        %574 = vmatpush1.bf16.msra.mxu0 0
        %575 = vmatprep.subr.bf16.mxu0 0
        %576 = vmatpush1.bf16.msra.mxu0 0
        %577 = vmatprep.subr.bf16.mxu0 0
        %578 = vmatpush1.bf16.msra.mxu0 0
        %579 = vmatprep.subr.bf16.mxu0 0
        %580 = vmatpush1.bf16.msra.mxu0 0
        %581 = vmatprep.subr.bf16.mxu0 0
        %582 = vmatpush1.bf16.msra.mxu0 0
        %583 = vmatprep.subr.bf16.mxu0 0
        %584 = vmatpush1.bf16.msra.mxu0 0
        %585 = vmatprep.subr.bf16.mxu0 0
        %586 = vmatpush1.bf16.msra.mxu0 0
        %587 = vmatprep.subr.bf16.mxu0 0
        %588 = vmatpush1.bf16.msra.mxu0 0
        %589 = vmatprep.subr.bf16.mxu0 0
        %590 = vmatpush1.bf16.msra.mxu0 0
        %591 = vmatprep.subr.bf16.mxu0 0
        %592 = vmatpush1.bf16.msra.mxu0 0
        %593 = vmatprep.subr.bf16.mxu0 0
        %594 = vmatpush1.bf16.msra.mxu0 0
        %595 = vmatprep.subr.bf16.mxu0 0
        %596 = vmatpush1.bf16.msra.mxu0 0
        %597 = vmatprep.subr.bf16.mxu0 0
        %598 = vmatpush1.bf16.msra.mxu0 0
        %599 = vmatprep.subr.bf16.mxu0 0
        %600 = vmatpush1.bf16.msra.mxu0 0
        %601 = vmatprep.mubr.bf16.mxu0 0
        %602 = vmatmul.mubr.bf16.gmra.mrb[0].mxu0 %v567
        %v603 = vpop.f32.mrb[0].mxu0
        %v604 = vadd.f32 %v551, %v603
        %v605 = vpop.f32.mrb[0].mxu0
        %v606 = vpop.f32.mrb[0].mxu0
        %v607 = vpop.f32.mrb[0].mxu0
        %608 = vdwg.mxu0
        %v609 = vpack.c.bf16 %v604, %v604
        %611 = vrot.lane.b32.xlu0 %v609, 96
        %v612 = vpop.permute.xlu0 %611
        %vm613 = vcmask 64512
        %v615 = vsel %vm613, %v609, 0
        %v618 = vsel %vm613, %v612, 0
        %620 = vmatprep.subr.bf16.mxu0 0
        %621 = vmatpush1.bf16.xpose.msra.mxu0 %v618
        %622 = vmatprep.subr.bf16.mxu0 0
        %623 = vmatpush1.bf16.xpose.msra.mxu0 0
        %624 = vmatprep.subr.bf16.mxu0 0
        %625 = vmatpush1.bf16.xpose.msra.mxu0 0
        %626 = vmatprep.subr.bf16.mxu0 0
        %627 = vmatpush1.bf16.xpose.msra.mxu0 0
        %628 = vmatprep.subr.bf16.mxu0 0
        %629 = vmatpush1.bf16.xpose.msra.mxu0 0
        %630 = vmatprep.subr.bf16.mxu0 0
        %631 = vmatpush1.bf16.xpose.msra.mxu0 0
        %632 = vmatprep.subr.bf16.mxu0 0
        %633 = vmatpush1.bf16.xpose.msra.mxu0 0
        %634 = vmatprep.subr.bf16.mxu0 0
        %635 = vmatpush1.bf16.xpose.msra.mxu0 0
        %636 = vmatprep.subr.bf16.mxu0 0
        %637 = vmatpush1.bf16.xpose.msra.mxu0 0
        %638 = vmatprep.subr.bf16.mxu0 0
        %639 = vmatpush1.bf16.xpose.msra.mxu0 0
        %640 = vmatprep.subr.bf16.mxu0 0
        %641 = vmatpush1.bf16.xpose.msra.mxu0 0
        %642 = vmatprep.subr.bf16.mxu0 0
        %643 = vmatpush1.bf16.xpose.msra.mxu0 0
        %644 = vmatprep.subr.bf16.mxu0 0
        %645 = vmatpush1.bf16.xpose.msra.mxu0 0
        %646 = vmatprep.subr.bf16.mxu0 0
        %647 = vmatpush1.bf16.xpose.msra.mxu0 0
        %648 = vmatprep.subr.bf16.mxu0 0
        %649 = vmatpush1.bf16.xpose.msra.mxu0 0
        %650 = vmatprep.subr.bf16.mxu0 0
        %651 = vmatpush1.bf16.xpose.msra.mxu0 0
        %652 = vmatprep.mubr.bf16.mxu0 0
        %653 = vmatmul.mubr.bf16.gmra.mrb[0].mxu0 %v615
        %v654 = vpop.f32.mrb[0].mxu0
        %v655 = vadd.f32 0.0, %v654
        %v656 = vpop.f32.mrb[0].mxu0
        %v657 = vpop.f32.mrb[0].mxu0
        %v658 = vpop.f32.mrb[0].mxu0
        %659 = vdwg.mxu0
        %v660 = vsel %vm613, %v655, -inf
        %661 = vmax.xlane.f32.xlu0 %v660
        %v662 = vpop.xlane.xlu0 %661
        %v663 = vsub.f32 %v655, %v662
        %v664 = vmul.f32 %v663, 1.442695
        %v665 = vpow.pop %v664
        %v666 = vsel %vm613, %v665, 0.0
        %667 = vadd.xlane.f32.xlu0 %v666
        %v668 = vpop.xlane.xlu0 %667
        %v669 = vrcp.pop %v668
        %v670 = vmul.f32 %v665, %v669
        %v671 = vpack.c.bf16 %v670, %v670
        %672 = vrot.lane.b32.xlu0 %v609, 64
        %v673 = vpop.permute.xlu0 %672
        %v675 = vsel %vm613, %v671, 0
        %vm677 = vcmask 1043456
        %v679 = vsel %vm677, %v673, 0
        %681 = vmatprep.subr.bf16.mxu0 0
        %682 = vmatpush1.bf16.msra.mxu0 %v679
        %683 = vmatprep.subr.bf16.mxu0 0
        %684 = vmatpush1.bf16.msra.mxu0 0
        %685 = vmatprep.subr.bf16.mxu0 0
        %686 = vmatpush1.bf16.msra.mxu0 0
        %687 = vmatprep.subr.bf16.mxu0 0
        %688 = vmatpush1.bf16.msra.mxu0 0
        %689 = vmatprep.subr.bf16.mxu0 0
        %690 = vmatpush1.bf16.msra.mxu0 0
        %691 = vmatprep.subr.bf16.mxu0 0
        %692 = vmatpush1.bf16.msra.mxu0 0
        %693 = vmatprep.subr.bf16.mxu0 0
        %694 = vmatpush1.bf16.msra.mxu0 0
        %695 = vmatprep.subr.bf16.mxu0 0
        %696 = vmatpush1.bf16.msra.mxu0 0
        %697 = vmatprep.subr.bf16.mxu0 0
        %698 = vmatpush1.bf16.msra.mxu0 0
        %699 = vmatprep.subr.bf16.mxu0 0
        %700 = vmatpush1.bf16.msra.mxu0 0
        %701 = vmatprep.subr.bf16.mxu0 0
        %702 = vmatpush1.bf16.msra.mxu0 0
        %703 = vmatprep.subr.bf16.mxu0 0
        %704 = vmatpush1.bf16.msra.mxu0 0
        %705 = vmatprep.subr.bf16.mxu0 0
        %706 = vmatpush1.bf16.msra.mxu0 0
        %707 = vmatprep.subr.bf16.mxu0 0
        %708 = vmatpush1.bf16.msra.mxu0 0
        %709 = vmatprep.subr.bf16.mxu0 0
        %710 = vmatpush1.bf16.msra.mxu0 0
        %711 = vmatprep.subr.bf16.mxu0 0
        %712 = vmatpush1.bf16.msra.mxu0 0
        %713 = vmatprep.mubr.bf16.mxu0 0
        %714 = vmatmul.mubr.bf16.gmra.mrb[0].mxu0 %v675
        %v715 = vpop.f32.mrb[0].mxu0
        %v716 = vadd.f32 0.0, %v715
        %v717 = vpop.f32.mrb[0].mxu0
        %v718 = vpop.f32.mrb[0].mxu0
        %v719 = vpop.f32.mrb[0].mxu0
        %720 = vdwg.mxu0
        %v721 = vpack.c.bf16 %v716, %v716
        %v722 = vld [vmem:[%s513] sm:$0xf]
        %723 = vrot.lane.b32.xlu0 %v609, 120
        %v724 = vpop.permute.xlu0 %723
        %725 = vrot.lane.b32.xlu0 %v609, 88
        %v726 = vpop.permute.xlu0 %725
        %v728 = vsel %vm613, %v724, 0
        %v731 = vsel %vm613, %v726, 0
        %733 = vmatprep.subr.bf16.mxu0 0
        %734 = vmatpush1.bf16.xpose.msra.mxu0 %v731
        %735 = vmatprep.subr.bf16.mxu0 0
        %736 = vmatpush1.bf16.xpose.msra.mxu0 0
        %737 = vmatprep.subr.bf16.mxu0 0
        %738 = vmatpush1.bf16.xpose.msra.mxu0 0
        %739 = vmatprep.subr.bf16.mxu0 0
        %740 = vmatpush1.bf16.xpose.msra.mxu0 0
        %741 = vmatprep.subr.bf16.mxu0 0
        %742 = vmatpush1.bf16.xpose.msra.mxu0 0
        %743 = vmatprep.subr.bf16.mxu0 0
        %744 = vmatpush1.bf16.xpose.msra.mxu0 0
        %745 = vmatprep.subr.bf16.mxu0 0
        %746 = vmatpush1.bf16.xpose.msra.mxu0 0
        %747 = vmatprep.subr.bf16.mxu0 0
        %748 = vmatpush1.bf16.xpose.msra.mxu0 0
        %749 = vmatprep.subr.bf16.mxu0 0
        %750 = vmatpush1.bf16.xpose.msra.mxu0 0
        %751 = vmatprep.subr.bf16.mxu0 0
        %752 = vmatpush1.bf16.xpose.msra.mxu0 0
        %753 = vmatprep.subr.bf16.mxu0 0
        %754 = vmatpush1.bf16.xpose.msra.mxu0 0
        %755 = vmatprep.subr.bf16.mxu0 0
        %756 = vmatpush1.bf16.xpose.msra.mxu0 0
        %757 = vmatprep.subr.bf16.mxu0 0
        %758 = vmatpush1.bf16.xpose.msra.mxu0 0
        %759 = vmatprep.subr.bf16.mxu0 0
        %760 = vmatpush1.bf16.xpose.msra.mxu0 0
        %761 = vmatprep.subr.bf16.mxu0 0
        %762 = vmatpush1.bf16.xpose.msra.mxu0 0
        %763 = vmatprep.subr.bf16.mxu0 0
        %764 = vmatpush1.bf16.xpose.msra.mxu0 0
        %765 = vmatprep.mubr.bf16.mxu0 0
        %766 = vmatmul.mubr.bf16.gmra.mrb[0].mxu0 %v728
        %v767 = vpop.f32.mrb[0].mxu0
        %v768 = vadd.f32 0.0, %v767
        %v769 = vpop.f32.mrb[0].mxu0
        %v770 = vpop.f32.mrb[0].mxu0
        %v771 = vpop.f32.mrb[0].mxu0
        %772 = vdwg.mxu0
        %v773 = vsel %vm613, %v768, -inf
        %774 = vmax.xlane.f32.xlu0 %v773
        %v775 = vpop.xlane.xlu0 %774
        %v776 = vsub.f32 %v768, %v775
        %v777 = vmul.f32 %v776, 1.442695
        %v778 = vpow.pop %v777
        %v779 = vsel %vm613, %v778, 0.0
        %780 = vadd.xlane.f32.xlu0 %v779
        %v781 = vpop.xlane.xlu0 %780
        %v782 = vrcp.pop %v781
        %v783 = vmul.f32 %v778, %v782
        %v784 = vpack.c.bf16 %v783, %v783
        %785 = vrot.lane.b32.xlu0 %v609, 56
        %v786 = vpop.permute.xlu0 %785
        %v788 = vsel %vm613, %v784, 0
        %v791 = vsel %vm677, %v786, 0
        %793 = vmatprep.subr.bf16.mxu0 0
        %794 = vmatpush1.bf16.msra.mxu0 %v791
        %795 = vmatprep.subr.bf16.mxu0 0
        %796 = vmatpush1.bf16.msra.mxu0 0
        %797 = vmatprep.subr.bf16.mxu0 0
        %798 = vmatpush1.bf16.msra.mxu0 0
        %799 = vmatprep.subr.bf16.mxu0 0
        %800 = vmatpush1.bf16.msra.mxu0 0
        %801 = vmatprep.subr.bf16.mxu0 0
        %802 = vmatpush1.bf16.msra.mxu0 0
        %803 = vmatprep.subr.bf16.mxu0 0
        %804 = vmatpush1.bf16.msra.mxu0 0
        %805 = vmatprep.subr.bf16.mxu0 0
        %806 = vmatpush1.bf16.msra.mxu0 0
        %807 = vmatprep.subr.bf16.mxu0 0
        %808 = vmatpush1.bf16.msra.mxu0 0
        %809 = vmatprep.subr.bf16.mxu0 0
        %810 = vmatpush1.bf16.msra.mxu0 0
        %811 = vmatprep.subr.bf16.mxu0 0
        %812 = vmatpush1.bf16.msra.mxu0 0
        %813 = vmatprep.subr.bf16.mxu0 0
        %814 = vmatpush1.bf16.msra.mxu0 0
        %815 = vmatprep.subr.bf16.mxu0 0
        %816 = vmatpush1.bf16.msra.mxu0 0
        %817 = vmatprep.subr.bf16.mxu0 0
        %818 = vmatpush1.bf16.msra.mxu0 0
        %819 = vmatprep.subr.bf16.mxu0 0
        %820 = vmatpush1.bf16.msra.mxu0 0
        %821 = vmatprep.subr.bf16.mxu0 0
        %822 = vmatpush1.bf16.msra.mxu0 0
        %823 = vmatprep.subr.bf16.mxu0 0
        %824 = vmatpush1.bf16.msra.mxu0 0
        %825 = vmatprep.mubr.bf16.mxu0 0
        %826 = vmatmul.mubr.bf16.gmra.mrb[0].mxu0 %v788
        %v827 = vpop.f32.mrb[0].mxu0
        %v828 = vadd.f32 0.0, %v827
        %v829 = vpop.f32.mrb[0].mxu0
        %v830 = vpop.f32.mrb[0].mxu0
        %v831 = vpop.f32.mrb[0].mxu0
        %832 = vdwg.mxu0
        %v833 = vpack.c.bf16 %v828, %v828
        %s834 = scalar_lea.vmem %s513, 4
        %v835 = vld [vmem:[%s834] sm:$0xf]
        %v837 = vsel %vm613, %v833, 0
        %v840 = vsel %vm677, %v835, 0
        %842 = vmatprep.subr.bf16.mxu0 0
        %843 = vmatpush1.bf16.msra.mxu0 %v840
        %844 = vmatprep.subr.bf16.mxu0 0
        %845 = vmatpush1.bf16.msra.mxu0 0
        %846 = vmatprep.subr.bf16.mxu0 0
        %847 = vmatpush1.bf16.msra.mxu0 0
        %848 = vmatprep.subr.bf16.mxu0 0
        %849 = vmatpush1.bf16.msra.mxu0 0
        %850 = vmatprep.subr.bf16.mxu0 0
        %851 = vmatpush1.bf16.msra.mxu0 0
        %852 = vmatprep.subr.bf16.mxu0 0
        %853 = vmatpush1.bf16.msra.mxu0 0
        %854 = vmatprep.subr.bf16.mxu0 0
        %855 = vmatpush1.bf16.msra.mxu0 0
        %856 = vmatprep.subr.bf16.mxu0 0
        %857 = vmatpush1.bf16.msra.mxu0 0
        %858 = vmatprep.subr.bf16.mxu0 0
        %859 = vmatpush1.bf16.msra.mxu0 0
        %860 = vmatprep.subr.bf16.mxu0 0
        %861 = vmatpush1.bf16.msra.mxu0 0
        %862 = vmatprep.subr.bf16.mxu0 0
        %863 = vmatpush1.bf16.msra.mxu0 0
        %864 = vmatprep.subr.bf16.mxu0 0
        %865 = vmatpush1.bf16.msra.mxu0 0
        %866 = vmatprep.subr.bf16.mxu0 0
        %867 = vmatpush1.bf16.msra.mxu0 0
        %868 = vmatprep.subr.bf16.mxu0 0
        %869 = vmatpush1.bf16.msra.mxu0 0
        %870 = vmatprep.subr.bf16.mxu0 0
        %871 = vmatpush1.bf16.msra.mxu0 0
        %872 = vmatprep.subr.bf16.mxu0 0
        %873 = vmatpush1.bf16.msra.mxu0 0
        %874 = vmatprep.mubr.bf16.mxu0 0
        %875 = vmatmul.mubr.bf16.gmra.mrb[0].mxu0 %v837
        %v876 = vpop.f32.mrb[0].mxu0
        %v877 = vadd.f32 0.0, %v876
        %v878 = vpop.f32.mrb[0].mxu0
        %v879 = vpop.f32.mrb[0].mxu0
        %v880 = vpop.f32.mrb[0].mxu0
        %881 = vdwg.mxu0
        %v883 = vsel %vm613, %v721, 0
        %v886 = vsel %vm677, %v722, 0
        %888 = vmatprep.subr.bf16.mxu0 0
        %889 = vmatpush1.bf16.msra.mxu0 %v886
        %890 = vmatprep.subr.bf16.mxu0 0
        %891 = vmatpush1.bf16.msra.mxu0 0
        %892 = vmatprep.subr.bf16.mxu0 0
        %893 = vmatpush1.bf16.msra.mxu0 0
        %894 = vmatprep.subr.bf16.mxu0 0
        %895 = vmatpush1.bf16.msra.mxu0 0
        %896 = vmatprep.subr.bf16.mxu0 0
        %897 = vmatpush1.bf16.msra.mxu0 0
        %898 = vmatprep.subr.bf16.mxu0 0
        %899 = vmatpush1.bf16.msra.mxu0 0
        %900 = vmatprep.subr.bf16.mxu0 0
        %901 = vmatpush1.bf16.msra.mxu0 0
        %902 = vmatprep.subr.bf16.mxu0 0
        %903 = vmatpush1.bf16.msra.mxu0 0
        %904 = vmatprep.subr.bf16.mxu0 0
        %905 = vmatpush1.bf16.msra.mxu0 0
        %906 = vmatprep.subr.bf16.mxu0 0
        %907 = vmatpush1.bf16.msra.mxu0 0
        %908 = vmatprep.subr.bf16.mxu0 0
        %909 = vmatpush1.bf16.msra.mxu0 0
        %910 = vmatprep.subr.bf16.mxu0 0
        %911 = vmatpush1.bf16.msra.mxu0 0
        %912 = vmatprep.subr.bf16.mxu0 0
        %913 = vmatpush1.bf16.msra.mxu0 0
        %914 = vmatprep.subr.bf16.mxu0 0
        %915 = vmatpush1.bf16.msra.mxu0 0
        %916 = vmatprep.subr.bf16.mxu0 0
        %917 = vmatpush1.bf16.msra.mxu0 0
        %918 = vmatprep.subr.bf16.mxu0 0
        %919 = vmatpush1.bf16.msra.mxu0 0
        %920 = vmatprep.mubr.bf16.mxu0 0
        %921 = vmatmul.mubr.bf16.gmra.mrb[0].mxu0 %v883
        %v922 = vpop.f32.mrb[0].mxu0
        %v923 = vadd.f32 %v877, %v922
        %v924 = vpop.f32.mrb[0].mxu0
        %v925 = vpop.f32.mrb[0].mxu0
        %v926 = vpop.f32.mrb[0].mxu0
        %927 = vdwg.mxu0
        %928 = vrot.lane.b32.xlu0 %v609, 112
        %v929 = vpop.permute.xlu0 %928
        %930 = vrot.lane.b32.xlu0 %v609, 80
        %v931 = vpop.permute.xlu0 %930
        %v933 = vsel %vm613, %v929, 0
        %v936 = vsel %vm613, %v931, 0
        %938 = vmatprep.subr.bf16.mxu0 0
        %939 = vmatpush1.bf16.xpose.msra.mxu0 %v936
        %940 = vmatprep.subr.bf16.mxu0 0
        %941 = vmatpush1.bf16.xpose.msra.mxu0 0
        %942 = vmatprep.subr.bf16.mxu0 0
        %943 = vmatpush1.bf16.xpose.msra.mxu0 0
        %944 = vmatprep.subr.bf16.mxu0 0
        %945 = vmatpush1.bf16.xpose.msra.mxu0 0
        %946 = vmatprep.subr.bf16.mxu0 0
        %947 = vmatpush1.bf16.xpose.msra.mxu0 0
        %948 = vmatprep.subr.bf16.mxu0 0
        %949 = vmatpush1.bf16.xpose.msra.mxu0 0
        %950 = vmatprep.subr.bf16.mxu0 0
        %951 = vmatpush1.bf16.xpose.msra.mxu0 0
        %952 = vmatprep.subr.bf16.mxu0 0
        %953 = vmatpush1.bf16.xpose.msra.mxu0 0
        %954 = vmatprep.subr.bf16.mxu0 0
        %955 = vmatpush1.bf16.xpose.msra.mxu0 0
        %956 = vmatprep.subr.bf16.mxu0 0
        %957 = vmatpush1.bf16.xpose.msra.mxu0 0
        %958 = vmatprep.subr.bf16.mxu0 0
        %959 = vmatpush1.bf16.xpose.msra.mxu0 0
        %960 = vmatprep.subr.bf16.mxu0 0
        %961 = vmatpush1.bf16.xpose.msra.mxu0 0
        %962 = vmatprep.subr.bf16.mxu0 0
        %963 = vmatpush1.bf16.xpose.msra.mxu0 0
        %964 = vmatprep.subr.bf16.mxu0 0
        %965 = vmatpush1.bf16.xpose.msra.mxu0 0
        %966 = vmatprep.subr.bf16.mxu0 0
        %967 = vmatpush1.bf16.xpose.msra.mxu0 0
        %968 = vmatprep.subr.bf16.mxu0 0
        %969 = vmatpush1.bf16.xpose.msra.mxu0 0
        %970 = vmatprep.mubr.bf16.mxu0 0
        %971 = vmatmul.mubr.bf16.gmra.mrb[0].mxu0 %v933
        %v972 = vpop.f32.mrb[0].mxu0
        %v973 = vadd.f32 0.0, %v972
        %v974 = vpop.f32.mrb[0].mxu0
        %v975 = vpop.f32.mrb[0].mxu0
        %v976 = vpop.f32.mrb[0].mxu0
        %977 = vdwg.mxu0
        %v978 = vsel %vm613, %v973, -inf
        %979 = vmax.xlane.f32.xlu0 %v978
        %v980 = vpop.xlane.xlu0 %979
        %v981 = vsub.f32 %v973, %v980
        %v982 = vmul.f32 %v981, 1.442695
        %v983 = vpow.pop %v982
        %v984 = vsel %vm613, %v983, 0.0
        %985 = vadd.xlane.f32.xlu0 %v984
        %v986 = vpop.xlane.xlu0 %985
        %v987 = vrcp.pop %v986
        %v988 = vmul.f32 %v983, %v987
        %v989 = vpack.c.bf16 %v988, %v988
        %990 = vrot.lane.b32.xlu0 %v609, 48
        %v991 = vpop.permute.xlu0 %990
        %v993 = vsel %vm613, %v989, 0
        %v996 = vsel %vm677, %v991, 0
        %998 = vmatprep.subr.bf16.mxu0 0
        %999 = vmatpush1.bf16.msra.mxu0 %v996
        %1000 = vmatprep.subr.bf16.mxu0 0
        %1001 = vmatpush1.bf16.msra.mxu0 0
        %1002 = vmatprep.subr.bf16.mxu0 0
        %1003 = vmatpush1.bf16.msra.mxu0 0
        %1004 = vmatprep.subr.bf16.mxu0 0
        %1005 = vmatpush1.bf16.msra.mxu0 0
        %1006 = vmatprep.subr.bf16.mxu0 0
        %1007 = vmatpush1.bf16.msra.mxu0 0
        %1008 = vmatprep.subr.bf16.mxu0 0
        %1009 = vmatpush1.bf16.msra.mxu0 0
        %1010 = vmatprep.subr.bf16.mxu0 0
        %1011 = vmatpush1.bf16.msra.mxu0 0
        %1012 = vmatprep.subr.bf16.mxu0 0
        %1013 = vmatpush1.bf16.msra.mxu0 0
        %1014 = vmatprep.subr.bf16.mxu0 0
        %1015 = vmatpush1.bf16.msra.mxu0 0
        %1016 = vmatprep.subr.bf16.mxu0 0
        %1017 = vmatpush1.bf16.msra.mxu0 0
        %1018 = vmatprep.subr.bf16.mxu0 0
        %1019 = vmatpush1.bf16.msra.mxu0 0
        %1020 = vmatprep.subr.bf16.mxu0 0
        %1021 = vmatpush1.bf16.msra.mxu0 0
        %1022 = vmatprep.subr.bf16.mxu0 0
        %1023 = vmatpush1.bf16.msra.mxu0 0
        %1024 = vmatprep.subr.bf16.mxu0 0
        %1025 = vmatpush1.bf16.msra.mxu0 0
        %1026 = vmatprep.subr.bf16.mxu0 0
        %1027 = vmatpush1.bf16.msra.mxu0 0
        %1028 = vmatprep.subr.bf16.mxu0 0
        %1029 = vmatpush1.bf16.msra.mxu0 0
        %1030 = vmatprep.mubr.bf16.mxu0 0
        %1031 = vmatmul.mubr.bf16.gmra.mrb[0].mxu0 %v993
        %v1032 = vpop.f32.mrb[0].mxu0
        %v1033 = vadd.f32 0.0, %v1032
        %v1034 = vpop.f32.mrb[0].mxu0
        %v1035 = vpop.f32.mrb[0].mxu0
        %v1036 = vpop.f32.mrb[0].mxu0
        %1037 = vdwg.mxu0
        %v1038 = vpack.c.bf16 %v1033, %v1033
        %s1039 = scalar_lea.vmem %s513, 8
        %v1040 = vld [vmem:[%s1039] sm:$0xf]
        %v1042 = vsel %vm613, %v1038, 0
        %v1045 = vsel %vm677, %v1040, 0
        %1047 = vmatprep.subr.bf16.mxu0 0
        %1048 = vmatpush1.bf16.msra.mxu0 %v1045
        %1049 = vmatprep.subr.bf16.mxu0 0
        %1050 = vmatpush1.bf16.msra.mxu0 0
        %1051 = vmatprep.subr.bf16.mxu0 0
        %1052 = vmatpush1.bf16.msra.mxu0 0
        %1053 = vmatprep.subr.bf16.mxu0 0
        %1054 = vmatpush1.bf16.msra.mxu0 0
        %1055 = vmatprep.subr.bf16.mxu0 0
        %1056 = vmatpush1.bf16.msra.mxu0 0
        %1057 = vmatprep.subr.bf16.mxu0 0
        %1058 = vmatpush1.bf16.msra.mxu0 0
        %1059 = vmatprep.subr.bf16.mxu0 0
        %1060 = vmatpush1.bf16.msra.mxu0 0
        %1061 = vmatprep.subr.bf16.mxu0 0
        %1062 = vmatpush1.bf16.msra.mxu0 0
        %1063 = vmatprep.subr.bf16.mxu0 0
        %1064 = vmatpush1.bf16.msra.mxu0 0
        %1065 = vmatprep.subr.bf16.mxu0 0
        %1066 = vmatpush1.bf16.msra.mxu0 0
        %1067 = vmatprep.subr.bf16.mxu0 0
        %1068 = vmatpush1.bf16.msra.mxu0 0
        %1069 = vmatprep.subr.bf16.mxu0 0
        %1070 = vmatpush1.bf16.msra.mxu0 0
        %1071 = vmatprep.subr.bf16.mxu0 0
        %1072 = vmatpush1.bf16.msra.mxu0 0
        %1073 = vmatprep.subr.bf16.mxu0 0
        %1074 = vmatpush1.bf16.msra.mxu0 0
        %1075 = vmatprep.subr.bf16.mxu0 0
        %1076 = vmatpush1.bf16.msra.mxu0 0
        %1077 = vmatprep.subr.bf16.mxu0 0
        %1078 = vmatpush1.bf16.msra.mxu0 0
        %1079 = vmatprep.mubr.bf16.mxu0 0
        %1080 = vmatmul.mubr.bf16.gmra.mrb[0].mxu0 %v1042
        %v1081 = vpop.f32.mrb[0].mxu0
        %v1082 = vadd.f32 0.0, %v1081
        %v1083 = vpop.f32.mrb[0].mxu0
        %v1084 = vpop.f32.mrb[0].mxu0
        %v1085 = vpop.f32.mrb[0].mxu0
        %1086 = vdwg.mxu0
        %v1087 = vadd.f32 %v923, %v1082
        %1088 = vrot.lane.b32.xlu0 %v609, 104
        %v1089 = vpop.permute.xlu0 %1088
        %1090 = vrot.lane.b32.xlu0 %v609, 72
        %v1091 = vpop.permute.xlu0 %1090
        %v1093 = vsel %vm613, %v1089, 0
        %v1096 = vsel %vm613, %v1091, 0
        %1098 = vmatprep.subr.bf16.mxu0 0
        %1099 = vmatpush1.bf16.xpose.msra.mxu0 %v1096
        %1100 = vmatprep.subr.bf16.mxu0 0
        %1101 = vmatpush1.bf16.xpose.msra.mxu0 0
        %1102 = vmatprep.subr.bf16.mxu0 0
        %1103 = vmatpush1.bf16.xpose.msra.mxu0 0
        %1104 = vmatprep.subr.bf16.mxu0 0
        %1105 = vmatpush1.bf16.xpose.msra.mxu0 0
        %1106 = vmatprep.subr.bf16.mxu0 0
        %1107 = vmatpush1.bf16.xpose.msra.mxu0 0
        %1108 = vmatprep.subr.bf16.mxu0 0
        %1109 = vmatpush1.bf16.xpose.msra.mxu0 0
        %1110 = vmatprep.subr.bf16.mxu0 0
        %1111 = vmatpush1.bf16.xpose.msra.mxu0 0
        %1112 = vmatprep.subr.bf16.mxu0 0
        %1113 = vmatpush1.bf16.xpose.msra.mxu0 0
        %1114 = vmatprep.subr.bf16.mxu0 0
        %1115 = vmatpush1.bf16.xpose.msra.mxu0 0
        %1116 = vmatprep.subr.bf16.mxu0 0
        %1117 = vmatpush1.bf16.xpose.msra.mxu0 0
        %1118 = vmatprep.subr.bf16.mxu0 0
        %1119 = vmatpush1.bf16.xpose.msra.mxu0 0
        %1120 = vmatprep.subr.bf16.mxu0 0
        %1121 = vmatpush1.bf16.xpose.msra.mxu0 0
        %1122 = vmatprep.subr.bf16.mxu0 0
        %1123 = vmatpush1.bf16.xpose.msra.mxu0 0
        %1124 = vmatprep.subr.bf16.mxu0 0
        %1125 = vmatpush1.bf16.xpose.msra.mxu0 0
        %1126 = vmatprep.subr.bf16.mxu0 0
        %1127 = vmatpush1.bf16.xpose.msra.mxu0 0
        %1128 = vmatprep.subr.bf16.mxu0 0
        %1129 = vmatpush1.bf16.xpose.msra.mxu0 0
        %1130 = vmatprep.mubr.bf16.mxu0 0
        %1131 = vmatmul.mubr.bf16.gmra.mrb[0].mxu0 %v1093
        %v1132 = vpop.f32.mrb[0].mxu0
        %v1133 = vadd.f32 0.0, %v1132
        %v1134 = vpop.f32.mrb[0].mxu0
        %v1135 = vpop.f32.mrb[0].mxu0
        %v1136 = vpop.f32.mrb[0].mxu0
        %1137 = vdwg.mxu0
        %v1138 = vsel %vm613, %v1133, -inf
        %1139 = vmax.xlane.f32.xlu0 %v1138
        %v1140 = vpop.xlane.xlu0 %1139
        %v1141 = vsub.f32 %v1133, %v1140
        %v1142 = vmul.f32 %v1141, 1.442695
        %v1143 = vpow.pop %v1142
        %v1144 = vsel %vm613, %v1143, 0.0
        %1145 = vadd.xlane.f32.xlu0 %v1144
        %v1146 = vpop.xlane.xlu0 %1145
        %v1147 = vrcp.pop %v1146
        %v1148 = vmul.f32 %v1143, %v1147
        %v1149 = vpack.c.bf16 %v1148, %v1148
        %1150 = vrot.lane.b32.xlu0 %v609, 40
        %v1151 = vpop.permute.xlu0 %1150
        %v1153 = vsel %vm613, %v1149, 0
        %v1156 = vsel %vm677, %v1151, 0
        %1158 = vmatprep.subr.bf16.mxu0 0
        %1159 = vmatpush1.bf16.msra.mxu0 %v1156
        %1160 = vmatprep.subr.bf16.mxu0 0
        %1161 = vmatpush1.bf16.msra.mxu0 0
        %1162 = vmatprep.subr.bf16.mxu0 0
        %1163 = vmatpush1.bf16.msra.mxu0 0
        %1164 = vmatprep.subr.bf16.mxu0 0
        %1165 = vmatpush1.bf16.msra.mxu0 0
        %1166 = vmatprep.subr.bf16.mxu0 0
        %1167 = vmatpush1.bf16.msra.mxu0 0
        %1168 = vmatprep.subr.bf16.mxu0 0
        %1169 = vmatpush1.bf16.msra.mxu0 0
        %1170 = vmatprep.subr.bf16.mxu0 0
        %1171 = vmatpush1.bf16.msra.mxu0 0
        %1172 = vmatprep.subr.bf16.mxu0 0
        %1173 = vmatpush1.bf16.msra.mxu0 0
        %1174 = vmatprep.subr.bf16.mxu0 0
        %1175 = vmatpush1.bf16.msra.mxu0 0
        %1176 = vmatprep.subr.bf16.mxu0 0
        %1177 = vmatpush1.bf16.msra.mxu0 0
        %1178 = vmatprep.subr.bf16.mxu0 0
        %1179 = vmatpush1.bf16.msra.mxu0 0
        %1180 = vmatprep.subr.bf16.mxu0 0
        %1181 = vmatpush1.bf16.msra.mxu0 0
        %1182 = vmatprep.subr.bf16.mxu0 0
        %1183 = vmatpush1.bf16.msra.mxu0 0
        %1184 = vmatprep.subr.bf16.mxu0 0
        %1185 = vmatpush1.bf16.msra.mxu0 0
        %1186 = vmatprep.subr.bf16.mxu0 0
        %1187 = vmatpush1.bf16.msra.mxu0 0
        %1188 = vmatprep.subr.bf16.mxu0 0
        %1189 = vmatpush1.bf16.msra.mxu0 0
        %1190 = vmatprep.mubr.bf16.mxu0 0
        %1191 = vmatmul.mubr.bf16.gmra.mrb[0].mxu0 %v1153
        %v1192 = vpop.f32.mrb[0].mxu0
        %v1193 = vadd.f32 0.0, %v1192
        %v1194 = vpop.f32.mrb[0].mxu0
        %v1195 = vpop.f32.mrb[0].mxu0
        %v1196 = vpop.f32.mrb[0].mxu0
        %1197 = vdwg.mxu0
        %v1198 = vpack.c.bf16 %v1193, %v1193
        %s1199 = scalar_lea.vmem %s513, 12
        %v1200 = vld [vmem:[%s1199] sm:$0xf]
        %v1202 = vsel %vm613, %v1198, 0
        %v1205 = vsel %vm677, %v1200, 0
        %1207 = vmatprep.subr.bf16.mxu0 0
        %1208 = vmatpush1.bf16.msra.mxu0 %v1205
        %1209 = vmatprep.subr.bf16.mxu0 0
        %1210 = vmatpush1.bf16.msra.mxu0 0
        %1211 = vmatprep.subr.bf16.mxu0 0
        %1212 = vmatpush1.bf16.msra.mxu0 0
        %1213 = vmatprep.subr.bf16.mxu0 0
        %1214 = vmatpush1.bf16.msra.mxu0 0
        %1215 = vmatprep.subr.bf16.mxu0 0
        %1216 = vmatpush1.bf16.msra.mxu0 0
        %1217 = vmatprep.subr.bf16.mxu0 0
        %1218 = vmatpush1.bf16.msra.mxu0 0
        %1219 = vmatprep.subr.bf16.mxu0 0
        %1220 = vmatpush1.bf16.msra.mxu0 0
        %1221 = vmatprep.subr.bf16.mxu0 0
        %1222 = vmatpush1.bf16.msra.mxu0 0
        %1223 = vmatprep.subr.bf16.mxu0 0
        %1224 = vmatpush1.bf16.msra.mxu0 0
        %1225 = vmatprep.subr.bf16.mxu0 0
        %1226 = vmatpush1.bf16.msra.mxu0 0
        %1227 = vmatprep.subr.bf16.mxu0 0
        %1228 = vmatpush1.bf16.msra.mxu0 0
        %1229 = vmatprep.subr.bf16.mxu0 0
        %1230 = vmatpush1.bf16.msra.mxu0 0
        %1231 = vmatprep.subr.bf16.mxu0 0
        %1232 = vmatpush1.bf16.msra.mxu0 0
        %1233 = vmatprep.subr.bf16.mxu0 0
        %1234 = vmatpush1.bf16.msra.mxu0 0
        %1235 = vmatprep.subr.bf16.mxu0 0
        %1236 = vmatpush1.bf16.msra.mxu0 0
        %1237 = vmatprep.subr.bf16.mxu0 0
        %1238 = vmatpush1.bf16.msra.mxu0 0
        %1239 = vmatprep.mubr.bf16.mxu0 0
        %1240 = vmatmul.mubr.bf16.gmra.mrb[0].mxu0 %v1202
        %v1241 = vpop.f32.mrb[0].mxu0
        %v1242 = vadd.f32 0.0, %v1241
        %v1243 = vpop.f32.mrb[0].mxu0
        %v1244 = vpop.f32.mrb[0].mxu0
        %v1245 = vpop.f32.mrb[0].mxu0
        %1246 = vdwg.mxu0
        %v1247 = vadd.f32 %v1087, %v1242
        %v1248 = vlaneseq
        %v1249 = vshrl.u32 %v1248, 7
        %v1250 = vsub.s32 0, %v1249
        %v1251 = vrot.slane %v540, %v1250
        %v1252 = vadd.f32 %v1247, %v1251
        %v1253 = vadd.f32 %v539, %v1252
        %v1254 = vsel %vm565, %v1253, 0.0
        %1255 = vadd.xlane.f32.xlu0 %v1254
        %v1256 = vpop.xlane.xlu0 %1255
        %v1257 = vrcp.pop 32.0
        %v1258 = vmul.f32 %v1256, %v1257
        %v1259 = vsub.f32 %v1253, %v1258
        %v1260 = vmul.f32 %v1259, %v1259
        %v1261 = vsel %vm565, %v1260, 0.0
        %1262 = vadd.xlane.f32.xlu0 %v1261
        %v1263 = vpop.xlane.xlu0 %1262
        %v1264 = vmul.f32 %v1263, %v1257
        %v1265 = vadd.f32 %v1264, 1e-05
        %v1266 = vrsqrt.pop %v1265
        %v1267 = vmul.f32 %v1259, %v1266
        %v1268 = vlaneseq
        %v1269 = vshrl.u32 %v1268, 7
        %v1270 = vsub.s32 1, %v1269
        %v1271 = vrot.slane %v540, %v1270
        %v1272 = vmul.f32 %v1267, %v1271
        %v1273 = vlaneseq
        %v1274 = vshrl.u32 %v1273, 7
        %v1275 = vsub.s32 2, %v1274
        %v1276 = vrot.slane %v540, %v1275
        %v1277 = vadd.f32 %v1272, %v1276
        %v1278 = vpack.c.bf16 %v1277, %v1277
        %v1279 = vld [vmem:[%s518] sm:$0xf]
        %v1280 = vld [vmem:[%s518 + $0x4] sm:$0xf]
        %v1281 = vld [vmem:[%s518 + $0x8] sm:$0xf]
        %v1282 = vld [vmem:[%s518 + $0xc] sm:$0xf]
        %v1283 = vld [vmem:[%s521] sm:$0x1]
        %v1285 = vlaneseq
        %v1286 = vshrl.u32 %v1285, 7
        %v1287 = vsub.s32 0, %v1286
        %v1288 = vrot.slane %v1283, %v1287
        %v1294 = vunpack.c.l.b16 %v1279
        %v1295 = vunpack.c.l.b16 %v1280
        %v1296 = vunpack.c.l.b16 %v1281
        %v1297 = vunpack.c.l.b16 %v1282
        %v1298 = vpack.c.b16 %v1295, %v1294
        %v1299 = vpack.c.b16 %v1297, %v1296
        %v1303 = vsel %vm565, %v1278, 0
        %1305 = vmatprep.subr.bf16.mxu0 0
        %1306 = vmatpush1.bf16.msra.mxu0 %v1298
        %1307 = vmatprep.subr.bf16.mxu0 0
        %1308 = vmatpush1.bf16.msra.mxu0 %v1299
        %1309 = vmatprep.subr.bf16.mxu0 0
        %1310 = vmatpush1.bf16.msra.mxu0 0
        %1311 = vmatprep.subr.bf16.mxu0 0
        %1312 = vmatpush1.bf16.msra.mxu0 0
        %1313 = vmatprep.subr.bf16.mxu0 0
        %1314 = vmatpush1.bf16.msra.mxu0 0
        %1315 = vmatprep.subr.bf16.mxu0 0
        %1316 = vmatpush1.bf16.msra.mxu0 0
        %1317 = vmatprep.subr.bf16.mxu0 0
        %1318 = vmatpush1.bf16.msra.mxu0 0
        %1319 = vmatprep.subr.bf16.mxu0 0
        %1320 = vmatpush1.bf16.msra.mxu0 0
        %1321 = vmatprep.subr.bf16.mxu0 0
        %1322 = vmatpush1.bf16.msra.mxu0 0
        %1323 = vmatprep.subr.bf16.mxu0 0
        %1324 = vmatpush1.bf16.msra.mxu0 0
        %1325 = vmatprep.subr.bf16.mxu0 0
        %1326 = vmatpush1.bf16.msra.mxu0 0
        %1327 = vmatprep.subr.bf16.mxu0 0
        %1328 = vmatpush1.bf16.msra.mxu0 0
        %1329 = vmatprep.subr.bf16.mxu0 0
        %1330 = vmatpush1.bf16.msra.mxu0 0
        %1331 = vmatprep.subr.bf16.mxu0 0
        %1332 = vmatpush1.bf16.msra.mxu0 0
        %1333 = vmatprep.subr.bf16.mxu0 0
        %1334 = vmatpush1.bf16.msra.mxu0 0
        %1335 = vmatprep.subr.bf16.mxu0 0
        %1336 = vmatpush1.bf16.msra.mxu0 0
        %1337 = vmatprep.mubr.bf16.mxu0 0
        %1338 = vmatmul.mubr.bf16.gmra.mrb[0].mxu0 %v1303
        %v1339 = vpop.f32.mrb[0].mxu0
        %v1340 = vadd.f32 %v1288, %v1339
        %v1341 = vpop.f32.mrb[0].mxu0
        %v1342 = vpop.f32.mrb[0].mxu0
        %v1343 = vpop.f32.mrb[0].mxu0
        %1344 = vdwg.mxu0
        %v1345 = vmax.f32 %v1340, 0.0
        %v1346 = vpack.c.bf16 %v1345, %v1345
        %v1347 = vld [vmem:[%s526] sm:$0xf]
        %v1348 = vld [vmem:[%s526 + $0x4] sm:$0xf]
        %v1349 = vld [vmem:[%s526 + $0x8] sm:$0xf]
        %v1350 = vld [vmem:[%s526 + $0xc] sm:$0xf]
        %v1351 = vlaneseq
        %v1352 = vshrl.u32 %v1351, 7
        %v1353 = vsub.s32 3, %v1352
        %v1354 = vrot.slane %v540, %v1353
        %v1359 = vunpack.c.l.b16 %v1347
        %v1360 = vunpack.c.l.b16 %v1348
        %v1361 = vunpack.c.l.b16 %v1349
        %v1362 = vunpack.c.l.b16 %v1350
        %v1363 = vpack.c.b16 %v1360, %v1359
        %v1364 = vpack.c.b16 %v1362, %v1361
        %v1368 = vsel %vm565, %v1346, 0
        %1370 = vmatprep.subr.bf16.mxu0 0
        %1371 = vmatpush1.bf16.msra.mxu0 %v1363
        %1372 = vmatprep.subr.bf16.mxu0 0
        %1373 = vmatpush1.bf16.msra.mxu0 %v1364
        %1374 = vmatprep.subr.bf16.mxu0 0
        %1375 = vmatpush1.bf16.msra.mxu0 0
        %1376 = vmatprep.subr.bf16.mxu0 0
        %1377 = vmatpush1.bf16.msra.mxu0 0
        %1378 = vmatprep.subr.bf16.mxu0 0
        %1379 = vmatpush1.bf16.msra.mxu0 0
        %1380 = vmatprep.subr.bf16.mxu0 0
        %1381 = vmatpush1.bf16.msra.mxu0 0
        %1382 = vmatprep.subr.bf16.mxu0 0
        %1383 = vmatpush1.bf16.msra.mxu0 0
        %1384 = vmatprep.subr.bf16.mxu0 0
        %1385 = vmatpush1.bf16.msra.mxu0 0
        %1386 = vmatprep.subr.bf16.mxu0 0
        %1387 = vmatpush1.bf16.msra.mxu0 0
        %1388 = vmatprep.subr.bf16.mxu0 0
        %1389 = vmatpush1.bf16.msra.mxu0 0
        %1390 = vmatprep.subr.bf16.mxu0 0
        %1391 = vmatpush1.bf16.msra.mxu0 0
        %1392 = vmatprep.subr.bf16.mxu0 0
        %1393 = vmatpush1.bf16.msra.mxu0 0
        %1394 = vmatprep.subr.bf16.mxu0 0
        %1395 = vmatpush1.bf16.msra.mxu0 0
        %1396 = vmatprep.subr.bf16.mxu0 0
        %1397 = vmatpush1.bf16.msra.mxu0 0
        %1398 = vmatprep.subr.bf16.mxu0 0
        %1399 = vmatpush1.bf16.msra.mxu0 0
        %1400 = vmatprep.subr.bf16.mxu0 0
        %1401 = vmatpush1.bf16.msra.mxu0 0
        %1402 = vmatprep.mubr.bf16.mxu0 0
        %1403 = vmatmul.mubr.bf16.gmra.mrb[0].mxu0 %v1368
        %v1404 = vpop.f32.mrb[0].mxu0
        %v1405 = vadd.f32 %v1354, %v1404
        %v1406 = vpop.f32.mrb[0].mxu0
        %v1407 = vpop.f32.mrb[0].mxu0
        %v1408 = vpop.f32.mrb[0].mxu0
        %1409 = vdwg.mxu0
        %v1410 = vadd.f32 %v1277, %v1405
        %v1411 = vsel %vm565, %v1410, 0.0
        %1412 = vadd.xlane.f32.xlu0 %v1411
        %v1413 = vpop.xlane.xlu0 %1412
        %v1414 = vmul.f32 %v1413, %v1257
        %v1415 = vsub.f32 %v1410, %v1414
        %v1416 = vmul.f32 %v1415, %v1415
        %v1417 = vsel %vm565, %v1416, 0.0
        %1418 = vadd.xlane.f32.xlu0 %v1417
        %v1419 = vpop.xlane.xlu0 %1418
        %v1420 = vmul.f32 %v1419, %v1257
        %v1421 = vadd.f32 %v1420, 1e-05
        %v1422 = vrsqrt.pop %v1421
        %v1423 = vmul.f32 %v1415, %v1422
        %v1424 = vlaneseq
        %v1425 = vshrl.u32 %v1424, 7
        %v1426 = vsub.s32 4, %v1425
        %v1427 = vrot.slane %v540, %v1426
        %v1428 = vmul.f32 %v1423, %v1427
        %v1429 = vlaneseq
        %v1430 = vshrl.u32 %v1429, 7
        %v1431 = vsub.s32 5, %v1430
        %v1432 = vrot.slane %v540, %v1431
        %v1433 = vadd.f32 %v1428, %v1432
        %1434 = vst.msk [vmem:[%s490] sm:$0xff] %vm565, %v1433
        %1435 = vst.msk [vmem:[#allocation2] sm:$0xff] %vm565, %v1433
        %p1436 = scmp.eq.s32.totalorder %s34, 1
        // Predicated region
        $region65: #{transformer_encoder_forward.1} parent=59 // pred_check
          %p1437 = pneg %p1436
        $region66: #{transformer_encoder_forward.1} parent=59 // pred_check_branch
          %1439 = sbr.rel (%p1437) target = $region68
        $region67: #{transformer_encoder_forward.1} parent=59 // pred_region
          %v1440 = vsel %vm565, %v1433, -inf
          %v1441 = vrot.slane %v1440, 4
          %v1442 = vmax.f32 %v1440, %v1441
          %v1443 = vrot.slane %v1442, 2
          %v1444 = vmax.f32 %v1442, %v1443
          %v1445 = vrot.slane %v1444, 1
          %v1446 = vmax.f32 %v1444, %v1445
          %v1447 = vpack.c.bf16 %v1446, %v1446
          %v1448 = vld [vmem:[%s8] sm:$0xf]
          %v1449 = vld [vmem:[%s8 + $0x4] sm:$0xf]
          %v1450 = vld [vmem:[%s8 + $0x8] sm:$0xf]
          %v1451 = vld [vmem:[%s8 + $0xc] sm:$0xf]
          %v1452 = vld [vmem:[%s9] sm:$0x1]
          %v1457 = vunpack.c.l.b16 %v1448
          %v1458 = vunpack.c.l.b16 %v1449
          %v1459 = vunpack.c.l.b16 %v1450
          %v1460 = vunpack.c.l.b16 %v1451
          %v1461 = vpack.c.b16 %v1458, %v1457
          %v1462 = vpack.c.b16 %v1460, %v1459
          %v1466 = vsel %vm565, %v1447, 0
          %1468 = vmatprep.subr.bf16.mxu0 0
          %1469 = vmatpush1.bf16.msra.mxu0 %v1461
          %1470 = vmatprep.subr.bf16.mxu0 0
          %1471 = vmatpush1.bf16.msra.mxu0 %v1462
          %1472 = vmatprep.subr.bf16.mxu0 0
          %1473 = vmatpush1.bf16.msra.mxu0 0
          %1474 = vmatprep.subr.bf16.mxu0 0
          %1475 = vmatpush1.bf16.msra.mxu0 0
          %1476 = vmatprep.subr.bf16.mxu0 0
          %1477 = vmatpush1.bf16.msra.mxu0 0
          %1478 = vmatprep.subr.bf16.mxu0 0
          %1479 = vmatpush1.bf16.msra.mxu0 0
          %1480 = vmatprep.subr.bf16.mxu0 0
          %1481 = vmatpush1.bf16.msra.mxu0 0
          %1482 = vmatprep.subr.bf16.mxu0 0
          %1483 = vmatpush1.bf16.msra.mxu0 0
          %1484 = vmatprep.subr.bf16.mxu0 0
          %1485 = vmatpush1.bf16.msra.mxu0 0
          %1486 = vmatprep.subr.bf16.mxu0 0
          %1487 = vmatpush1.bf16.msra.mxu0 0
          %1488 = vmatprep.subr.bf16.mxu0 0
          %1489 = vmatpush1.bf16.msra.mxu0 0
          %1490 = vmatprep.subr.bf16.mxu0 0
          %1491 = vmatpush1.bf16.msra.mxu0 0
          %1492 = vmatprep.subr.bf16.mxu0 0
          %1493 = vmatpush1.bf16.msra.mxu0 0
          %1494 = vmatprep.subr.bf16.mxu0 0
          %1495 = vmatpush1.bf16.msra.mxu0 0
          %1496 = vmatprep.subr.bf16.mxu0 0
          %1497 = vmatpush1.bf16.msra.mxu0 0
          %1498 = vmatprep.subr.bf16.mxu0 0
          %1499 = vmatpush1.bf16.msra.mxu0 0
          %1500 = vmatprep.mubr.bf16.mxu0 0
          %1501 = vmatmul.mubr.bf16.gmra.mrb[0].mxu0 %v1466
          %v1502 = vpop.f32.mrb[0].mxu0
          %v1503 = vadd.f32 %v1452, %v1502
          %v1504 = vpop.f32.mrb[0].mxu0
          %v1505 = vpop.f32.mrb[0].mxu0
          %v1506 = vpop.f32.mrb[0].mxu0
          %1507 = vdwg.mxu0
          %v1508 = vtanh.pop %v1503
          %vm1509 = vcmask 253952
          %1510 = vst.msk [vmem:[%s496] sm:$0x1] %vm1509, %v1508
        $region68: #{transformer_encoder_forward.1} parent=59 // pred_fallthru
          _
        %s1511 = sand.u32 %s301, 1
        %s1512 = scalar_lea.sflag [#allocation4], %s1511
        %s1513 = sand.u32 %s301, 1
        %s1514 = smul.addr %s1513, 8
        %s1515 = scalar_lea.vmem [#allocation3], %s1514
        %s1516 = sand.u32 %s327, 1
        %s1517 = scalar_lea.sflag [#allocation6], %s1516
        %s1518 = sand.u32 %s327, 1
        %s1519 = scalar_lea.vmem [#allocation5], %s1518
        // Predicated region
        $region69: #{transformer_encoder_forward.1} parent=59 // pred_check
          %p1520 = pneg %p311
        $region70: #{transformer_encoder_forward.1} parent=59 // pred_check_branch
          %1522 = sbr.rel (%p1520) target = $region72
        $region71: #{transformer_encoder_forward.1} parent=59 // pred_region
          %s1524 = ssub.s32 128, 128
          %1525 = vsyncadd %s1512, %s1524
          %s1526 = smul.addr %s34, 2
          %s1527 = sadd.s32 %s33, %s1526
          %s1528 = smul.addr %s1527, 128
          %s1529 = scalar_lea.hbm %s10, %s1528
          %s1531 = sshll.u32 %s1515, 4
          %s1532 = int_to_ptr.vmem [resolvable:$true] %s1531
          %1534 = dma.vmem_to_hbm [thread:$0]  %s1532, 128, %s1529, %s1512
        $region72: #{transformer_encoder_forward.1} parent=59 // pred_fallthru
          _
        // Predicated region
        $region73: #{transformer_encoder_forward.1} parent=59 // pred_check
          %p1535 = pneg %p337
        $region74: #{transformer_encoder_forward.1} parent=59 // pred_check_branch
          %1537 = sbr.rel (%p1535) target = $region76
        $region75: #{transformer_encoder_forward.1} parent=59 // pred_region
          %s1539 = ssub.s32 16, 16
          %1540 = vsyncadd %s1517, %s1539
          %s1541 = smul.addr %s33, 16
          %s1542 = scalar_lea.hbm %s11, %s1541
          %s1544 = sshll.u32 %s1519, 4
          %s1545 = int_to_ptr.vmem [resolvable:$true] %s1544
          %1547 = dma.vmem_to_hbm [thread:$0]  %s1545, 16, %s1542, %s1517
        $region76: #{transformer_encoder_forward.1} parent=59 // pred_fallthru
          _
      $region60: #{transformer_encoder_forward.1} parent=5 // pred_fallthru
        _
      %p1548 = scmp.le.s32.totalorder 2, %s24
      // Predicated region
      $region77: #{transformer_encoder_forward.1} parent=5 // pred_check
        %p1549 = pneg %p1548
      $region78: #{transformer_encoder_forward.1} parent=5 // pred_check_branch
        %1551 = sbr.rel (%p1549) target = $region80
      $region79: #{transformer_encoder_forward.1} parent=5 // pred_region
        %s1552 = ssub.s32 %s24, 2
        // Predicated region
        $region81: #{transformer_encoder_forward.1} parent=79 // pred_check
          %p1553 = pneg %p317
        $region82: #{transformer_encoder_forward.1} parent=79 // pred_check_branch
          %1555 = sbr.rel (%p1553) target = $region84
        $region83: #{transformer_encoder_forward.1} parent=79 // pred_region
          %s1556 = sand.u32 %s302, 1
          %s1557 = scalar_lea.sflag [#allocation4], %s1556
          %s1558 = sand.u32 %s302, 1
          %s1559 = smul.addr %s1558, 8
          %s1560 = scalar_lea.vmem [#allocation3], %s1559
          %1561 = dma.done %s1557, 128
        $region84: #{transformer_encoder_forward.1} parent=79 // pred_fallthru
          _
        // Predicated region
        $region85: #{transformer_encoder_forward.1} parent=79 // pred_check
          %p1562 = pneg %p343
        $region86: #{transformer_encoder_forward.1} parent=79 // pred_check_branch
          %1564 = sbr.rel (%p1562) target = $region88
        $region87: #{transformer_encoder_forward.1} parent=79 // pred_region
          %s1565 = sand.u32 %s328, 1
          %s1566 = scalar_lea.sflag [#allocation6], %s1565
          %s1567 = sand.u32 %s328, 1
          %s1568 = scalar_lea.vmem [#allocation5], %s1567
          %1569 = dma.done %s1566, 16
        $region88: #{transformer_encoder_forward.1} parent=79 // pred_fallthru
          _
      $region80: #{transformer_encoder_forward.1} parent=5 // pred_fallthru
        _
    $region6: #{transformer_encoder_forward.1} parent=1 // loop_footer
      %s28 = sadd.s32 1, %s24
    $region7: #{transformer_encoder_forward.1} parent=1 // loop_footer_branch
      %23 = sbr.rel target = $region3
    $region8: #{transformer_encoder_forward.1} parent=1 // loop_exit
      _
    %1570 = vsyncpa [#allocation4], 1
    %s1571 = scalar_lea.sflag [#allocation4], 1
    %1572 = vsyncpa %s1571, 1
    %1573 = vsyncpa [#allocation6], 1
    %s1574 = scalar_lea.sflag [#allocation6], 1
    %1575 = vsyncpa %s1574, 1

</llo_original>
